<compile_context>
chip_gen: v7x
topology: tpu7x:2x2x1
jax: 0.10.0
libtpu: 0.0.40
codegen_flags: <defaults>
</compile_context>

<pallas_src>
import math
import functools

import jax
import jax.numpy as jnp
from jax.experimental import pallas as pl
from jax.experimental.pallas import tpu as pltpu  # noqa: F401  (TPU backend)

HIDDEN = 32   # hidden_size
SEQ = 8       # sequence length
VOCAB = 64    # toy vocab (len(tokenizer))
FFN = 64      # feed-forward width
BATCH = 2
LN_EPS = 1e-12


# ----------------------------- fused Pallas kernel -----------------------------

def _ln(x, g, b):
    mu = jnp.mean(x, axis=-1, keepdims=True)
    var = jnp.mean((x - mu) ** 2, axis=-1, keepdims=True)
    return (x - mu) * jax.lax.rsqrt(var + LN_EPS) * g + b


def _fused_biencoder_kernel(
        ids_ref, seg_ref, addmask_ref, label_ref, pw_ref,
        tok_ref, pos_ref, typ_ref, ln_emb_g_ref, ln_emb_b_ref,
        wqkv_ref, bqkv_ref, wo_ref, bo_ref, ln1_g_ref, ln1_b_ref,
        w1_ref, b1_ref, w2_ref, b2_ref, ln2_g_ref, ln2_b_ref,
        w_lin_ref, b_lin_ref,
        score_ref, loss_ref,
        *, scale, n_seq, seq_len, batch, hidden, vocab):
    n_rows = n_seq * seq_len

    # ---- embeddings: token gather as one-hot MXU matmul + pos + type + LN ----
    ids = ids_ref[...]                                          # (N, 1) int32
    onehot = (jax.lax.broadcasted_iota(jnp.int32, (n_rows, vocab), 1)
              == ids).astype(jnp.float32)                       # (N, V)
    x = jnp.dot(onehot, tok_ref[...], preferred_element_type=jnp.float32)
    x = x + jnp.concatenate([pos_ref[...]] * n_seq, axis=0)     # tiled pos emb
    typ = typ_ref[...]                                          # (2, H)
    x = x + jnp.where(seg_ref[...] > 0, typ[1:2, :], typ[0:1, :])
    x = _ln(x, ln_emb_g_ref[...], ln_emb_b_ref[...])            # (N, H)

    # ---- single-head self-attention with fused QKV projection ----------------
    qkv = jnp.dot(x, wqkv_ref[...], preferred_element_type=jnp.float32) + bqkv_ref[...]
    q = qkv[:, 0:hidden]
    k = qkv[:, hidden:2 * hidden]
    v = qkv[:, 2 * hidden:3 * hidden]
    addm = addmask_ref[...]                                     # (n_seq, L) additive mask
    ctx_parts = []
    for s in range(n_seq):                                      # unrolled, tiny
        r0 = s * seq_len
        qs = q[r0:r0 + seq_len, :]
        ks = k[r0:r0 + seq_len, :]
        vs = v[r0:r0 + seq_len, :]
        sc = jax.lax.dot_general(qs, ks, (((1,), (1,)), ((), ())),
                                 preferred_element_type=jnp.float32) * scale
        sc = sc + addm[s:s + 1, :]                              # broadcast over query rows
        sc = sc - jnp.max(sc, axis=-1, keepdims=True)           # stable softmax
        p = jnp.exp(sc)
        p = p * pl.reciprocal(jnp.sum(p, axis=-1, keepdims=True), approx=True)
        ctx_parts.append(jnp.dot(p, vs, preferred_element_type=jnp.float32))
    ctx = jnp.concatenate(ctx_parts, axis=0)                    # (N, H)
    attn = jnp.dot(ctx, wo_ref[...], preferred_element_type=jnp.float32) + bo_ref[...]
    x = _ln(x + attn, ln1_g_ref[...], ln1_b_ref[...])

    # ---- feed-forward ---------------------------------------------------------
    h = jnp.dot(x, w1_ref[...], preferred_element_type=jnp.float32) + b1_ref[...]
    # TODO(synk): HF BertModel uses exact erf GELU; tanh approximation used here.
    h = jax.nn.gelu(h, approximate=True)
    h = jnp.dot(h, w2_ref[...], preferred_element_type=jnp.float32) + b2_ref[...]
    x = _ln(x + h, ln2_g_ref[...], ln2_b_ref[...])

    # ---- CLS pooling + final Linear -> tower embeddings ----------------------
    cls = jnp.concatenate(
        [x[s * seq_len:s * seq_len + 1, :] for s in range(n_seq)], axis=0)  # (n_seq, H)
    emb = jnp.dot(cls, w_lin_ref[...], preferred_element_type=jnp.float32) + b_lin_ref[...]
    eq = emb[0:batch, :]                                        # query embeddings
    ec = emb[batch:2 * batch, :]                                # candidate embeddings

    # ---- compute_score (per-row dot) + BCEWithLogits(pos_weight) loss --------
    s_score = jnp.sum(eq * ec, axis=-1, keepdims=True)          # (B, 1)
    score_ref[...] = s_score
    y = label_ref[...]                                          # (B, 1)
    pw = pw_ref[...]                                            # (1, 1)
    abs_s = jnp.abs(s_score)
    log_term = jnp.log(1.0 + jnp.exp(-abs_s))
    sp_neg = jnp.maximum(-s_score, 0.0) + log_term              # softplus(-x)
    sp_pos = jnp.maximum(s_score, 0.0) + log_term               # softplus(x)
    per_ex = pw * y * sp_neg + (1.0 - y) * sp_pos
    loss_ref[...] = jnp.sum(per_ex, axis=0, keepdims=True) * (1.0 / batch)


# --------------------------------- JAX glue ---------------------------------

def init_params(key):
    # TODO(synk): pretrained BertModel weights cannot be loaded; deterministic
    # single-layer, single-head BERT-style encoder with the same interface
    # (last_hidden_state[:, 0, :] CLS pooling + final Linear).
    ks = jax.random.split(key, 10)
    n = lambda k, shape: (0.02 * jax.random.normal(k, shape)).astype(jnp.float32)
    z = lambda shape: jnp.zeros(shape, jnp.float32)
    o = lambda shape: jnp.ones(shape, jnp.float32)
    return dict(
        tok_emb=n(ks[0], (VOCAB, HIDDEN)),
        pos_emb=n(ks[1], (SEQ, HIDDEN)),
        typ_emb=n(ks[2], (2, HIDDEN)),
        ln_emb_g=o((HIDDEN,)), ln_emb_b=z((HIDDEN,)),
        wq=n(ks[3], (HIDDEN, HIDDEN)), bq=z((HIDDEN,)),
        wk=n(ks[4], (HIDDEN, HIDDEN)), bk=z((HIDDEN,)),
        wv=n(ks[5], (HIDDEN, HIDDEN)), bv=z((HIDDEN,)),
        wo=n(ks[6], (HIDDEN, HIDDEN)), bo=z((HIDDEN,)),
        ln1_g=o((HIDDEN,)), ln1_b=z((HIDDEN,)),
        w1=n(ks[7], (HIDDEN, FFN)), b1=z((FFN,)),
        w2=n(ks[8], (FFN, HIDDEN)), b2=z((HIDDEN,)),
        ln2_g=o((HIDDEN,)), ln2_b=z((HIDDEN,)),
        w_lin=n(ks[9], (HIDDEN, HIDDEN)), b_lin=z((HIDDEN,)),  # Bert_model.linear
    )


def biencoder_forward(p, ids_q, mask_q, seg_q, ids_c, mask_c, seg_c, label, pos_weight):
    B, L = ids_q.shape
    H = HIDDEN
    n_seq = 2 * B  # query tower rows followed by candidate tower rows

    ids = jnp.concatenate([ids_q, ids_c], axis=0).reshape(n_seq * L, 1).astype(jnp.int32)
    seg = jnp.concatenate([seg_q, seg_c], axis=0).reshape(n_seq * L, 1).astype(jnp.int32)
    masks = jnp.concatenate([mask_q, mask_c], axis=0).astype(jnp.float32)      # (2B, L)
    add_mask = (1.0 - masks) * -1e9                                            # additive mask

    wqkv = jnp.concatenate([p["wq"], p["wk"], p["wv"]], axis=1)                # (H, 3H)
    bqkv = jnp.concatenate([p["bq"], p["bk"], p["bv"]]).reshape(1, 3 * H)
    r1 = lambda a: a.reshape(1, -1)

    kernel = functools.partial(
        _fused_biencoder_kernel,
        scale=1.0 / math.sqrt(H), n_seq=n_seq, seq_len=L, batch=B,
        hidden=H, vocab=VOCAB)

    score, loss = pl.pallas_call(
        kernel,
        out_shape=(jax.ShapeDtypeStruct((B, 1), jnp.float32),
                   jax.ShapeDtypeStruct((1, 1), jnp.float32)),
    )(ids, seg, add_mask,
      label.reshape(B, 1).astype(jnp.float32),
      pos_weight.reshape(1, 1).astype(jnp.float32),
      p["tok_emb"], p["pos_emb"], p["typ_emb"],
      r1(p["ln_emb_g"]), r1(p["ln_emb_b"]),
      wqkv, bqkv, p["wo"], r1(p["bo"]),
      r1(p["ln1_g"]), r1(p["ln1_b"]),
      p["w1"], r1(p["b1"]), p["w2"], r1(p["b2"]),
      r1(p["ln2_g"]), r1(p["ln2_b"]),
      p["w_lin"], r1(p["b_lin"]))
    return score.reshape(B), loss.reshape(())


if __name__ == "__main__":
    key = jax.random.PRNGKey(0)
    kp, k1, k2, k3 = jax.random.split(key, 4)
    params = init_params(kp)

    ids_q = jax.random.randint(k1, (BATCH, SEQ), 0, VOCAB, dtype=jnp.int32)
    ids_c = jax.random.randint(k2, (BATCH, SEQ), 0, VOCAB, dtype=jnp.int32)
    mask_q = jnp.ones((BATCH, SEQ), jnp.int32)
    mask_c = jnp.ones((BATCH, SEQ), jnp.int32).at[:, SEQ - 2:].set(0)
    seg_q = jnp.zeros((BATCH, SEQ), jnp.int32)
    seg_c = jnp.zeros((BATCH, SEQ), jnp.int32)
    label = jax.random.bernoulli(k3, 0.5, (BATCH,)).astype(jnp.float32)
    pos_weight = jnp.array([2.0], jnp.float32)

    score, loss = jax.jit(biencoder_forward)(
        params, ids_q, mask_q, seg_q, ids_c, mask_c, seg_c, label, pos_weight)
    jax.block_until_ready((score, loss))
    assert score.shape == (BATCH,) and loss.shape == ()
    assert bool(jnp.isfinite(loss)) and bool(jnp.all(jnp.isfinite(score)))
    print("KERNEL_OK")
</pallas_src>

<mosaic_0001>
module attributes {stable_mosaic.version = 11 : i64} {
  func.func @_fused_biencoder_kernel(%arg0: memref<32x1xi32, #tpu.memory_space<vmem>>, %arg1: memref<32x1xi32, #tpu.memory_space<vmem>>, %arg2: memref<4x8xf32, #tpu.memory_space<vmem>>, %arg3: memref<2x1xf32, #tpu.memory_space<vmem>>, %arg4: memref<1x1xf32, #tpu.memory_space<vmem>>, %arg5: memref<64x32xf32, #tpu.memory_space<vmem>>, %arg6: memref<8x32xf32, #tpu.memory_space<vmem>>, %arg7: memref<2x32xf32, #tpu.memory_space<vmem>>, %arg8: memref<1x32xf32, #tpu.memory_space<vmem>>, %arg9: memref<1x32xf32, #tpu.memory_space<vmem>>, %arg10: memref<32x96xf32, #tpu.memory_space<vmem>>, %arg11: memref<1x96xf32, #tpu.memory_space<vmem>>, %arg12: memref<32x32xf32, #tpu.memory_space<vmem>>, %arg13: memref<1x32xf32, #tpu.memory_space<vmem>>, %arg14: memref<1x32xf32, #tpu.memory_space<vmem>>, %arg15: memref<1x32xf32, #tpu.memory_space<vmem>>, %arg16: memref<32x64xf32, #tpu.memory_space<vmem>>, %arg17: memref<1x64xf32, #tpu.memory_space<vmem>>, %arg18: memref<64x32xf32, #tpu.memory_space<vmem>>, %arg19: memref<1x32xf32, #tpu.memory_space<vmem>>, %arg20: memref<1x32xf32, #tpu.memory_space<vmem>>, %arg21: memref<1x32xf32, #tpu.memory_space<vmem>>, %arg22: memref<32x32xf32, #tpu.memory_space<vmem>>, %arg23: memref<1x32xf32, #tpu.memory_space<vmem>>, %arg24: memref<2x1xf32, #tpu.memory_space<vmem>>, %arg25: memref<1x1xf32, #tpu.memory_space<vmem>>) attributes {dimension_semantics = [], scalar_prefetch = 0 : i64, scratch_operands = 0 : i64, tpu.core_type = #tpu.core_type<tc>} {
    %c0 = arith.constant 0 : index
    %c0_0 = arith.constant 0 : index
    %0 = vector.load %arg0[%c0, %c0_0] : memref<32x1xi32, #tpu.memory_space<vmem>>, vector<32x1xi32>
    %1 = tpu.iota {dimensions = array<i32: 1>} : vector<32x64xi32>
    %2 = vector.broadcast %0 : vector<32x1xi32> to vector<32x64xi32>
    %3 = arith.cmpi eq, %1, %2 : vector<32x64xi32>
    %4 = arith.extui %3 : vector<32x64xi1> to vector<32x64xi32>
    %5 = arith.sitofp %4 : vector<32x64xi32> to vector<32x64xf32>
    %c0_1 = arith.constant 0 : index
    %c0_2 = arith.constant 0 : index
    %6 = vector.load %arg5[%c0_1, %c0_2] : memref<64x32xf32, #tpu.memory_space<vmem>>, vector<64x32xf32>
    %cst = arith.constant dense<0.000000e+00> : vector<32x32xf32>
    %7 = tpu.matmul %5, %6, %cst {dimension_numbers = #tpu.dot_dimension_numbers<[1], [0], [0], [1], [0, 0, 1, 1], [], []>} : vector<32x64xf32>, vector<64x32xf32>, vector<32x32xf32> -> vector<32x32xf32>
    %c0_3 = arith.constant 0 : index
    %c0_4 = arith.constant 0 : index
    %8 = vector.load %arg6[%c0_3, %c0_4] : memref<8x32xf32, #tpu.memory_space<vmem>>, vector<8x32xf32>
    %9 = tpu.concatenate %8, %8, %8, %8 in 0 : vector<8x32xf32>, vector<8x32xf32>, vector<8x32xf32>, vector<8x32xf32> -> vector<32x32xf32>
    %10 = arith.addf %7, %9 : vector<32x32xf32>
    %c0_5 = arith.constant 0 : index
    %c0_6 = arith.constant 0 : index
    %11 = vector.load %arg7[%c0_5, %c0_6] : memref<2x32xf32, #tpu.memory_space<vmem>>, vector<2x32xf32>
    %c0_7 = arith.constant 0 : index
    %c0_8 = arith.constant 0 : index
    %12 = vector.load %arg1[%c0_7, %c0_8] : memref<32x1xi32, #tpu.memory_space<vmem>>, vector<32x1xi32>
    %c0_i32 = arith.constant 0 : i32
    %13 = vector.broadcast %c0_i32 : i32 to vector<32x1xi32>
    %14 = arith.cmpi sgt, %12, %13 : vector<32x1xi32>
    %15 = vector.extract_strided_slice %11 {offsets = [1, 0], sizes = [1, 32], strides = [1, 1]} : vector<2x32xf32> to vector<1x32xf32>
    %16 = vector.extract_strided_slice %11 {offsets = [0, 0], sizes = [1, 32], strides = [1, 1]} : vector<2x32xf32> to vector<1x32xf32>
    %17 = vector.shape_cast %14 : vector<32x1xi1> to vector<32x1xi1>
    %18 = vector.broadcast %17 : vector<32x1xi1> to vector<32x32xi1>
    %19 = vector.shape_cast %15 : vector<1x32xf32> to vector<1x32xf32>
    %20 = vector.broadcast %19 : vector<1x32xf32> to vector<32x32xf32>
    %21 = vector.shape_cast %16 : vector<1x32xf32> to vector<1x32xf32>
    %22 = vector.broadcast %21 : vector<1x32xf32> to vector<32x32xf32>
    %23 = arith.select %18, %20, %22 : vector<32x32xi1>, vector<32x32xf32>
    %24 = arith.addf %10, %23 : vector<32x32xf32>
    %c0_9 = arith.constant 0 : index
    %c0_10 = arith.constant 0 : index
    %25 = vector.load %arg8[%c0_9, %c0_10] : memref<1x32xf32, #tpu.memory_space<vmem>>, vector<1x32xf32>
    %c0_11 = arith.constant 0 : index
    %c0_12 = arith.constant 0 : index
    %26 = vector.load %arg9[%c0_11, %c0_12] : memref<1x32xf32, #tpu.memory_space<vmem>>, vector<1x32xf32>
    %cst_13 = arith.constant dense<0.000000e+00> : vector<32xf32>
    %27 = vector.multi_reduction <add>, %24, %cst_13 [1] : vector<32x32xf32> to vector<32xf32>
    %28 = vector.shape_cast %27 : vector<32xf32> to vector<32x1xf32>
    %cst_14 = arith.constant 3.200000e+01 : f32
    %29 = vector.broadcast %cst_14 : f32 to vector<32x1xf32>
    %30 = arith.divf %28, %29 : vector<32x1xf32>
    %31 = vector.broadcast %30 : vector<32x1xf32> to vector<32x32xf32>
    %32 = arith.subf %24, %31 : vector<32x32xf32>
    %33 = arith.mulf %32, %32 : vector<32x32xf32>
    %cst_15 = arith.constant dense<0.000000e+00> : vector<32xf32>
    %34 = vector.multi_reduction <add>, %33, %cst_15 [1] : vector<32x32xf32> to vector<32xf32>
    %35 = vector.shape_cast %34 : vector<32xf32> to vector<32x1xf32>
    %cst_16 = arith.constant 3.200000e+01 : f32
    %36 = vector.broadcast %cst_16 : f32 to vector<32x1xf32>
    %37 = arith.divf %35, %36 : vector<32x1xf32>
    %38 = vector.broadcast %30 : vector<32x1xf32> to vector<32x32xf32>
    %39 = arith.subf %24, %38 : vector<32x32xf32>
    %cst_17 = arith.constant 9.99999996E-13 : f32
    %40 = vector.broadcast %cst_17 : f32 to vector<32x1xf32>
    %41 = arith.addf %37, %40 : vector<32x1xf32>
    %42 = math.rsqrt %41 : vector<32x1xf32>
    %43 = vector.broadcast %42 : vector<32x1xf32> to vector<32x32xf32>
    %44 = arith.mulf %39, %43 : vector<32x32xf32>
    %45 = vector.broadcast %25 : vector<1x32xf32> to vector<32x32xf32>
    %46 = arith.mulf %44, %45 : vector<32x32xf32>
    %47 = vector.broadcast %26 : vector<1x32xf32> to vector<32x32xf32>
    %48 = arith.addf %46, %47 : vector<32x32xf32>
    %c0_18 = arith.constant 0 : index
    %c0_19 = arith.constant 0 : index
    %49 = vector.load %arg10[%c0_18, %c0_19] : memref<32x96xf32, #tpu.memory_space<vmem>>, vector<32x96xf32>
    %cst_20 = arith.constant dense<0.000000e+00> : vector<32x96xf32>
    %50 = tpu.matmul %48, %49, %cst_20 {dimension_numbers = #tpu.dot_dimension_numbers<[1], [0], [0], [1], [0, 0, 1, 1], [], []>} : vector<32x32xf32>, vector<32x96xf32>, vector<32x96xf32> -> vector<32x96xf32>
    %c0_21 = arith.constant 0 : index
    %c0_22 = arith.constant 0 : index
    %51 = vector.load %arg11[%c0_21, %c0_22] : memref<1x96xf32, #tpu.memory_space<vmem>>, vector<1x96xf32>
    %52 = vector.broadcast %51 : vector<1x96xf32> to vector<32x96xf32>
    %53 = arith.addf %50, %52 : vector<32x96xf32>
    %54 = vector.extract_strided_slice %53 {offsets = [0, 0], sizes = [32, 32], strides = [1, 1]} : vector<32x96xf32> to vector<32x32xf32>
    %55 = vector.extract_strided_slice %53 {offsets = [0, 32], sizes = [32, 32], strides = [1, 1]} : vector<32x96xf32> to vector<32x32xf32>
    %56 = vector.extract_strided_slice %53 {offsets = [0, 64], sizes = [32, 32], strides = [1, 1]} : vector<32x96xf32> to vector<32x32xf32>
    %c0_23 = arith.constant 0 : index
    %c0_24 = arith.constant 0 : index
    %57 = vector.load %arg2[%c0_23, %c0_24] : memref<4x8xf32, #tpu.memory_space<vmem>>, vector<4x8xf32>
    %58 = vector.extract_strided_slice %54 {offsets = [0, 0], sizes = [8, 32], strides = [1, 1]} : vector<32x32xf32> to vector<8x32xf32>
    %59 = vector.extract_strided_slice %55 {offsets = [0, 0], sizes = [8, 32], strides = [1, 1]} : vector<32x32xf32> to vector<8x32xf32>
    %60 = vector.extract_strided_slice %56 {offsets = [0, 0], sizes = [8, 32], strides = [1, 1]} : vector<32x32xf32> to vector<8x32xf32>
    %cst_25 = arith.constant dense<0.000000e+00> : vector<8x8xf32>
    %61 = tpu.matmul %58, %59, %cst_25 {dimension_numbers = #tpu.dot_dimension_numbers<[1], [1], [0], [0], [0, 0, 1, 0], [], []>} : vector<8x32xf32>, vector<8x32xf32>, vector<8x8xf32> -> vector<8x8xf32>
    %cst_26 = arith.constant 0.176776692 : f32
    %62 = vector.broadcast %cst_26 : f32 to vector<8x8xf32>
    %63 = arith.mulf %61, %62 : vector<8x8xf32>
    %64 = vector.extract_strided_slice %57 {offsets = [0, 0], sizes = [1, 8], strides = [1, 1]} : vector<4x8xf32> to vector<1x8xf32>
    %65 = vector.broadcast %64 : vector<1x8xf32> to vector<8x8xf32>
    %66 = arith.addf %63, %65 : vector<8x8xf32>
    %cst_27 = arith.constant dense<0xFF800000> : vector<8xf32>
    %67 = vector.multi_reduction <maximumf>, %66, %cst_27 [1] : vector<8x8xf32> to vector<8xf32>
    %68 = vector.shape_cast %67 : vector<8xf32> to vector<8x1xf32>
    %69 = vector.broadcast %68 : vector<8x1xf32> to vector<8x8xf32>
    %70 = arith.subf %66, %69 : vector<8x8xf32>
    %71 = math.exp %70 : vector<8x8xf32>
    %cst_28 = arith.constant dense<0.000000e+00> : vector<8xf32>
    %72 = vector.multi_reduction <add>, %71, %cst_28 [1] : vector<8x8xf32> to vector<8xf32>
    %73 = vector.shape_cast %72 : vector<8xf32> to vector<8x1xf32>
    %74 = tpu.reciprocal %73 {approx = true} : vector<8x1xf32> -> vector<8x1xf32>
    %75 = vector.broadcast %74 : vector<8x1xf32> to vector<8x8xf32>
    %76 = arith.mulf %71, %75 : vector<8x8xf32>
    %cst_29 = arith.constant dense<0.000000e+00> : vector<8x32xf32>
    %77 = tpu.matmul %76, %60, %cst_29 {dimension_numbers = #tpu.dot_dimension_numbers<[1], [0], [0], [1], [0, 0, 1, 1], [], []>} : vector<8x8xf32>, vector<8x32xf32>, vector<8x32xf32> -> vector<8x32xf32>
    %78 = vector.extract_strided_slice %54 {offsets = [8, 0], sizes = [8, 32], strides = [1, 1]} : vector<32x32xf32> to vector<8x32xf32>
    %79 = vector.extract_strided_slice %55 {offsets = [8, 0], sizes = [8, 32], strides = [1, 1]} : vector<32x32xf32> to vector<8x32xf32>
    %80 = vector.extract_strided_slice %56 {offsets = [8, 0], sizes = [8, 32], strides = [1, 1]} : vector<32x32xf32> to vector<8x32xf32>
    %cst_30 = arith.constant dense<0.000000e+00> : vector<8x8xf32>
    %81 = tpu.matmul %78, %79, %cst_30 {dimension_numbers = #tpu.dot_dimension_numbers<[1], [1], [0], [0], [0, 0, 1, 0], [], []>} : vector<8x32xf32>, vector<8x32xf32>, vector<8x8xf32> -> vector<8x8xf32>
    %cst_31 = arith.constant 0.176776692 : f32
    %82 = vector.broadcast %cst_31 : f32 to vector<8x8xf32>
    %83 = arith.mulf %81, %82 : vector<8x8xf32>
    %84 = vector.extract_strided_slice %57 {offsets = [1, 0], sizes = [1, 8], strides = [1, 1]} : vector<4x8xf32> to vector<1x8xf32>
    %85 = vector.broadcast %84 : vector<1x8xf32> to vector<8x8xf32>
    %86 = arith.addf %83, %85 : vector<8x8xf32>
    %cst_32 = arith.constant dense<0xFF800000> : vector<8xf32>
    %87 = vector.multi_reduction <maximumf>, %86, %cst_32 [1] : vector<8x8xf32> to vector<8xf32>
    %88 = vector.shape_cast %87 : vector<8xf32> to vector<8x1xf32>
    %89 = vector.broadcast %88 : vector<8x1xf32> to vector<8x8xf32>
    %90 = arith.subf %86, %89 : vector<8x8xf32>
    %91 = math.exp %90 : vector<8x8xf32>
    %cst_33 = arith.constant dense<0.000000e+00> : vector<8xf32>
    %92 = vector.multi_reduction <add>, %91, %cst_33 [1] : vector<8x8xf32> to vector<8xf32>
    %93 = vector.shape_cast %92 : vector<8xf32> to vector<8x1xf32>
    %94 = tpu.reciprocal %93 {approx = true} : vector<8x1xf32> -> vector<8x1xf32>
    %95 = vector.broadcast %94 : vector<8x1xf32> to vector<8x8xf32>
    %96 = arith.mulf %91, %95 : vector<8x8xf32>
    %cst_34 = arith.constant dense<0.000000e+00> : vector<8x32xf32>
    %97 = tpu.matmul %96, %80, %cst_34 {dimension_numbers = #tpu.dot_dimension_numbers<[1], [0], [0], [1], [0, 0, 1, 1], [], []>} : vector<8x8xf32>, vector<8x32xf32>, vector<8x32xf32> -> vector<8x32xf32>
    %98 = vector.extract_strided_slice %54 {offsets = [16, 0], sizes = [8, 32], strides = [1, 1]} : vector<32x32xf32> to vector<8x32xf32>
    %99 = vector.extract_strided_slice %55 {offsets = [16, 0], sizes = [8, 32], strides = [1, 1]} : vector<32x32xf32> to vector<8x32xf32>
    %100 = vector.extract_strided_slice %56 {offsets = [16, 0], sizes = [8, 32], strides = [1, 1]} : vector<32x32xf32> to vector<8x32xf32>
    %cst_35 = arith.constant dense<0.000000e+00> : vector<8x8xf32>
    %101 = tpu.matmul %98, %99, %cst_35 {dimension_numbers = #tpu.dot_dimension_numbers<[1], [1], [0], [0], [0, 0, 1, 0], [], []>} : vector<8x32xf32>, vector<8x32xf32>, vector<8x8xf32> -> vector<8x8xf32>
    %cst_36 = arith.constant 0.176776692 : f32
    %102 = vector.broadcast %cst_36 : f32 to vector<8x8xf32>
    %103 = arith.mulf %101, %102 : vector<8x8xf32>
    %104 = vector.extract_strided_slice %57 {offsets = [2, 0], sizes = [1, 8], strides = [1, 1]} : vector<4x8xf32> to vector<1x8xf32>
    %105 = vector.broadcast %104 : vector<1x8xf32> to vector<8x8xf32>
    %106 = arith.addf %103, %105 : vector<8x8xf32>
    %cst_37 = arith.constant dense<0xFF800000> : vector<8xf32>
    %107 = vector.multi_reduction <maximumf>, %106, %cst_37 [1] : vector<8x8xf32> to vector<8xf32>
    %108 = vector.shape_cast %107 : vector<8xf32> to vector<8x1xf32>
    %109 = vector.broadcast %108 : vector<8x1xf32> to vector<8x8xf32>
    %110 = arith.subf %106, %109 : vector<8x8xf32>
    %111 = math.exp %110 : vector<8x8xf32>
    %cst_38 = arith.constant dense<0.000000e+00> : vector<8xf32>
    %112 = vector.multi_reduction <add>, %111, %cst_38 [1] : vector<8x8xf32> to vector<8xf32>
    %113 = vector.shape_cast %112 : vector<8xf32> to vector<8x1xf32>
    %114 = tpu.reciprocal %113 {approx = true} : vector<8x1xf32> -> vector<8x1xf32>
    %115 = vector.broadcast %114 : vector<8x1xf32> to vector<8x8xf32>
    %116 = arith.mulf %111, %115 : vector<8x8xf32>
    %cst_39 = arith.constant dense<0.000000e+00> : vector<8x32xf32>
    %117 = tpu.matmul %116, %100, %cst_39 {dimension_numbers = #tpu.dot_dimension_numbers<[1], [0], [0], [1], [0, 0, 1, 1], [], []>} : vector<8x8xf32>, vector<8x32xf32>, vector<8x32xf32> -> vector<8x32xf32>
    %118 = vector.extract_strided_slice %54 {offsets = [24, 0], sizes = [8, 32], strides = [1, 1]} : vector<32x32xf32> to vector<8x32xf32>
    %119 = vector.extract_strided_slice %55 {offsets = [24, 0], sizes = [8, 32], strides = [1, 1]} : vector<32x32xf32> to vector<8x32xf32>
    %120 = vector.extract_strided_slice %56 {offsets = [24, 0], sizes = [8, 32], strides = [1, 1]} : vector<32x32xf32> to vector<8x32xf32>
    %cst_40 = arith.constant dense<0.000000e+00> : vector<8x8xf32>
    %121 = tpu.matmul %118, %119, %cst_40 {dimension_numbers = #tpu.dot_dimension_numbers<[1], [1], [0], [0], [0, 0, 1, 0], [], []>} : vector<8x32xf32>, vector<8x32xf32>, vector<8x8xf32> -> vector<8x8xf32>
    %cst_41 = arith.constant 0.176776692 : f32
    %122 = vector.broadcast %cst_41 : f32 to vector<8x8xf32>
    %123 = arith.mulf %121, %122 : vector<8x8xf32>
    %124 = vector.extract_strided_slice %57 {offsets = [3, 0], sizes = [1, 8], strides = [1, 1]} : vector<4x8xf32> to vector<1x8xf32>
    %125 = vector.broadcast %124 : vector<1x8xf32> to vector<8x8xf32>
    %126 = arith.addf %123, %125 : vector<8x8xf32>
    %cst_42 = arith.constant dense<0xFF800000> : vector<8xf32>
    %127 = vector.multi_reduction <maximumf>, %126, %cst_42 [1] : vector<8x8xf32> to vector<8xf32>
    %128 = vector.shape_cast %127 : vector<8xf32> to vector<8x1xf32>
    %129 = vector.broadcast %128 : vector<8x1xf32> to vector<8x8xf32>
    %130 = arith.subf %126, %129 : vector<8x8xf32>
    %131 = math.exp %130 : vector<8x8xf32>
    %cst_43 = arith.constant dense<0.000000e+00> : vector<8xf32>
    %132 = vector.multi_reduction <add>, %131, %cst_43 [1] : vector<8x8xf32> to vector<8xf32>
    %133 = vector.shape_cast %132 : vector<8xf32> to vector<8x1xf32>
    %134 = tpu.reciprocal %133 {approx = true} : vector<8x1xf32> -> vector<8x1xf32>
    %135 = vector.broadcast %134 : vector<8x1xf32> to vector<8x8xf32>
    %136 = arith.mulf %131, %135 : vector<8x8xf32>
    %cst_44 = arith.constant dense<0.000000e+00> : vector<8x32xf32>
    %137 = tpu.matmul %136, %120, %cst_44 {dimension_numbers = #tpu.dot_dimension_numbers<[1], [0], [0], [1], [0, 0, 1, 1], [], []>} : vector<8x8xf32>, vector<8x32xf32>, vector<8x32xf32> -> vector<8x32xf32>
    %138 = tpu.concatenate %77, %97, %117, %137 in 0 : vector<8x32xf32>, vector<8x32xf32>, vector<8x32xf32>, vector<8x32xf32> -> vector<32x32xf32>
    %c0_45 = arith.constant 0 : index
    %c0_46 = arith.constant 0 : index
    %139 = vector.load %arg12[%c0_45, %c0_46] : memref<32x32xf32, #tpu.memory_space<vmem>>, vector<32x32xf32>
    %cst_47 = arith.constant dense<0.000000e+00> : vector<32x32xf32>
    %140 = tpu.matmul %138, %139, %cst_47 {dimension_numbers = #tpu.dot_dimension_numbers<[1], [0], [0], [1], [0, 0, 1, 1], [], []>} : vector<32x32xf32>, vector<32x32xf32>, vector<32x32xf32> -> vector<32x32xf32>
    %c0_48 = arith.constant 0 : index
    %c0_49 = arith.constant 0 : index
    %141 = vector.load %arg13[%c0_48, %c0_49] : memref<1x32xf32, #tpu.memory_space<vmem>>, vector<1x32xf32>
    %142 = vector.broadcast %141 : vector<1x32xf32> to vector<32x32xf32>
    %143 = arith.addf %140, %142 : vector<32x32xf32>
    %144 = arith.addf %48, %143 : vector<32x32xf32>
    %c0_50 = arith.constant 0 : index
    %c0_51 = arith.constant 0 : index
    %145 = vector.load %arg14[%c0_50, %c0_51] : memref<1x32xf32, #tpu.memory_space<vmem>>, vector<1x32xf32>
    %c0_52 = arith.constant 0 : index
    %c0_53 = arith.constant 0 : index
    %146 = vector.load %arg15[%c0_52, %c0_53] : memref<1x32xf32, #tpu.memory_space<vmem>>, vector<1x32xf32>
    %cst_54 = arith.constant dense<0.000000e+00> : vector<32xf32>
    %147 = vector.multi_reduction <add>, %144, %cst_54 [1] : vector<32x32xf32> to vector<32xf32>
    %148 = vector.shape_cast %147 : vector<32xf32> to vector<32x1xf32>
    %cst_55 = arith.constant 3.200000e+01 : f32
    %149 = vector.broadcast %cst_55 : f32 to vector<32x1xf32>
    %150 = arith.divf %148, %149 : vector<32x1xf32>
    %151 = vector.broadcast %150 : vector<32x1xf32> to vector<32x32xf32>
    %152 = arith.subf %144, %151 : vector<32x32xf32>
    %153 = arith.mulf %152, %152 : vector<32x32xf32>
    %cst_56 = arith.constant dense<0.000000e+00> : vector<32xf32>
    %154 = vector.multi_reduction <add>, %153, %cst_56 [1] : vector<32x32xf32> to vector<32xf32>
    %155 = vector.shape_cast %154 : vector<32xf32> to vector<32x1xf32>
    %cst_57 = arith.constant 3.200000e+01 : f32
    %156 = vector.broadcast %cst_57 : f32 to vector<32x1xf32>
    %157 = arith.divf %155, %156 : vector<32x1xf32>
    %158 = vector.broadcast %150 : vector<32x1xf32> to vector<32x32xf32>
    %159 = arith.subf %144, %158 : vector<32x32xf32>
    %cst_58 = arith.constant 9.99999996E-13 : f32
    %160 = vector.broadcast %cst_58 : f32 to vector<32x1xf32>
    %161 = arith.addf %157, %160 : vector<32x1xf32>
    %162 = math.rsqrt %161 : vector<32x1xf32>
    %163 = vector.broadcast %162 : vector<32x1xf32> to vector<32x32xf32>
    %164 = arith.mulf %159, %163 : vector<32x32xf32>
    %165 = vector.broadcast %145 : vector<1x32xf32> to vector<32x32xf32>
    %166 = arith.mulf %164, %165 : vector<32x32xf32>
    %167 = vector.broadcast %146 : vector<1x32xf32> to vector<32x32xf32>
    %168 = arith.addf %166, %167 : vector<32x32xf32>
    %c0_59 = arith.constant 0 : index
    %c0_60 = arith.constant 0 : index
    %169 = vector.load %arg16[%c0_59, %c0_60] : memref<32x64xf32, #tpu.memory_space<vmem>>, vector<32x64xf32>
    %cst_61 = arith.constant dense<0.000000e+00> : vector<32x64xf32>
    %170 = tpu.matmul %168, %169, %cst_61 {dimension_numbers = #tpu.dot_dimension_numbers<[1], [0], [0], [1], [0, 0, 1, 1], [], []>} : vector<32x32xf32>, vector<32x64xf32>, vector<32x64xf32> -> vector<32x64xf32>
    %c0_62 = arith.constant 0 : index
    %c0_63 = arith.constant 0 : index
    %171 = vector.load %arg17[%c0_62, %c0_63] : memref<1x64xf32, #tpu.memory_space<vmem>>, vector<1x64xf32>
    %172 = vector.broadcast %171 : vector<1x64xf32> to vector<32x64xf32>
    %173 = arith.addf %170, %172 : vector<32x64xf32>
    %174 = arith.mulf %173, %173 : vector<32x64xf32>
    %175 = arith.mulf %173, %174 : vector<32x64xf32>
    %cst_64 = arith.constant 4.471500e-02 : f32
    %176 = vector.broadcast %cst_64 : f32 to vector<32x64xf32>
    %177 = arith.mulf %176, %175 : vector<32x64xf32>
    %178 = arith.addf %173, %177 : vector<32x64xf32>
    %cst_65 = arith.constant 0.797884583 : f32
    %179 = vector.broadcast %cst_65 : f32 to vector<32x64xf32>
    %180 = arith.mulf %179, %178 : vector<32x64xf32>
    %181 = math.tanh %180 : vector<32x64xf32>
    %cst_66 = arith.constant 1.000000e+00 : f32
    %182 = vector.broadcast %cst_66 : f32 to vector<32x64xf32>
    %183 = arith.addf %182, %181 : vector<32x64xf32>
    %cst_67 = arith.constant 5.000000e-01 : f32
    %184 = vector.broadcast %cst_67 : f32 to vector<32x64xf32>
    %185 = arith.mulf %184, %183 : vector<32x64xf32>
    %186 = arith.mulf %173, %185 : vector<32x64xf32>
    %c0_68 = arith.constant 0 : index
    %c0_69 = arith.constant 0 : index
    %187 = vector.load %arg18[%c0_68, %c0_69] : memref<64x32xf32, #tpu.memory_space<vmem>>, vector<64x32xf32>
    %cst_70 = arith.constant dense<0.000000e+00> : vector<32x32xf32>
    %188 = tpu.matmul %186, %187, %cst_70 {dimension_numbers = #tpu.dot_dimension_numbers<[1], [0], [0], [1], [0, 0, 1, 1], [], []>} : vector<32x64xf32>, vector<64x32xf32>, vector<32x32xf32> -> vector<32x32xf32>
    %c0_71 = arith.constant 0 : index
    %c0_72 = arith.constant 0 : index
    %189 = vector.load %arg19[%c0_71, %c0_72] : memref<1x32xf32, #tpu.memory_space<vmem>>, vector<1x32xf32>
    %190 = vector.broadcast %189 : vector<1x32xf32> to vector<32x32xf32>
    %191 = arith.addf %188, %190 : vector<32x32xf32>
    %192 = arith.addf %168, %191 : vector<32x32xf32>
    %c0_73 = arith.constant 0 : index
    %c0_74 = arith.constant 0 : index
    %193 = vector.load %arg20[%c0_73, %c0_74] : memref<1x32xf32, #tpu.memory_space<vmem>>, vector<1x32xf32>
    %c0_75 = arith.constant 0 : index
    %c0_76 = arith.constant 0 : index
    %194 = vector.load %arg21[%c0_75, %c0_76] : memref<1x32xf32, #tpu.memory_space<vmem>>, vector<1x32xf32>
    %cst_77 = arith.constant dense<0.000000e+00> : vector<32xf32>
    %195 = vector.multi_reduction <add>, %192, %cst_77 [1] : vector<32x32xf32> to vector<32xf32>
    %196 = vector.shape_cast %195 : vector<32xf32> to vector<32x1xf32>
    %cst_78 = arith.constant 3.200000e+01 : f32
    %197 = vector.broadcast %cst_78 : f32 to vector<32x1xf32>
    %198 = arith.divf %196, %197 : vector<32x1xf32>
    %199 = vector.broadcast %198 : vector<32x1xf32> to vector<32x32xf32>
    %200 = arith.subf %192, %199 : vector<32x32xf32>
    %201 = arith.mulf %200, %200 : vector<32x32xf32>
    %cst_79 = arith.constant dense<0.000000e+00> : vector<32xf32>
    %202 = vector.multi_reduction <add>, %201, %cst_79 [1] : vector<32x32xf32> to vector<32xf32>
    %203 = vector.shape_cast %202 : vector<32xf32> to vector<32x1xf32>
    %cst_80 = arith.constant 3.200000e+01 : f32
    %204 = vector.broadcast %cst_80 : f32 to vector<32x1xf32>
    %205 = arith.divf %203, %204 : vector<32x1xf32>
    %206 = vector.broadcast %198 : vector<32x1xf32> to vector<32x32xf32>
    %207 = arith.subf %192, %206 : vector<32x32xf32>
    %cst_81 = arith.constant 9.99999996E-13 : f32
    %208 = vector.broadcast %cst_81 : f32 to vector<32x1xf32>
    %209 = arith.addf %205, %208 : vector<32x1xf32>
    %210 = math.rsqrt %209 : vector<32x1xf32>
    %211 = vector.broadcast %210 : vector<32x1xf32> to vector<32x32xf32>
    %212 = arith.mulf %207, %211 : vector<32x32xf32>
    %213 = vector.broadcast %193 : vector<1x32xf32> to vector<32x32xf32>
    %214 = arith.mulf %212, %213 : vector<32x32xf32>
    %215 = vector.broadcast %194 : vector<1x32xf32> to vector<32x32xf32>
    %216 = arith.addf %214, %215 : vector<32x32xf32>
    %217 = vector.extract_strided_slice %216 {offsets = [0, 0], sizes = [1, 32], strides = [1, 1]} : vector<32x32xf32> to vector<1x32xf32>
    %218 = vector.extract_strided_slice %216 {offsets = [8, 0], sizes = [1, 32], strides = [1, 1]} : vector<32x32xf32> to vector<1x32xf32>
    %219 = vector.extract_strided_slice %216 {offsets = [16, 0], sizes = [1, 32], strides = [1, 1]} : vector<32x32xf32> to vector<1x32xf32>
    %220 = vector.extract_strided_slice %216 {offsets = [24, 0], sizes = [1, 32], strides = [1, 1]} : vector<32x32xf32> to vector<1x32xf32>
    %221 = tpu.concatenate %217, %218, %219, %220 in 0 : vector<1x32xf32>, vector<1x32xf32>, vector<1x32xf32>, vector<1x32xf32> -> vector<4x32xf32>
    %c0_82 = arith.constant 0 : index
    %c0_83 = arith.constant 0 : index
    %222 = vector.load %arg22[%c0_82, %c0_83] : memref<32x32xf32, #tpu.memory_space<vmem>>, vector<32x32xf32>
    %cst_84 = arith.constant dense<0.000000e+00> : vector<4x32xf32>
    %223 = tpu.matmul %221, %222, %cst_84 {dimension_numbers = #tpu.dot_dimension_numbers<[1], [0], [0], [1], [0, 0, 1, 1], [], []>} : vector<4x32xf32>, vector<32x32xf32>, vector<4x32xf32> -> vector<4x32xf32>
    %c0_85 = arith.constant 0 : index
    %c0_86 = arith.constant 0 : index
    %224 = vector.load %arg23[%c0_85, %c0_86] : memref<1x32xf32, #tpu.memory_space<vmem>>, vector<1x32xf32>
    %225 = vector.broadcast %224 : vector<1x32xf32> to vector<4x32xf32>
    %226 = arith.addf %223, %225 : vector<4x32xf32>
    %227 = vector.extract_strided_slice %226 {offsets = [0, 0], sizes = [2, 32], strides = [1, 1]} : vector<4x32xf32> to vector<2x32xf32>
    %228 = vector.extract_strided_slice %226 {offsets = [2, 0], sizes = [2, 32], strides = [1, 1]} : vector<4x32xf32> to vector<2x32xf32>
    %229 = arith.mulf %227, %228 : vector<2x32xf32>
    %cst_87 = arith.constant dense<0.000000e+00> : vector<2xf32>
    %230 = vector.multi_reduction <add>, %229, %cst_87 [1] : vector<2x32xf32> to vector<2xf32>
    %231 = vector.shape_cast %230 : vector<2xf32> to vector<2x1xf32>
    %c0_88 = arith.constant 0 : index
    %c0_89 = arith.constant 0 : index
    %232 = vector.load %arg24[%c0_88, %c0_89] : memref<2x1xf32, #tpu.memory_space<vmem>>, vector<2x1xf32>
    tpu.vector_store %arg24[%c0_88, %c0_89], %231 {strides = array<i32>} : memref<2x1xf32, #tpu.memory_space<vmem>>, vector<2x1xf32>,
    %c0_90 = arith.constant 0 : index
    %c0_91 = arith.constant 0 : index
    %233 = vector.load %arg3[%c0_90, %c0_91] : memref<2x1xf32, #tpu.memory_space<vmem>>, vector<2x1xf32>
    %c0_92 = arith.constant 0 : index
    %c0_93 = arith.constant 0 : index
    %234 = vector.load %arg4[%c0_92, %c0_93] : memref<1x1xf32, #tpu.memory_space<vmem>>, vector<1x1xf32>
    %235 = math.absf %231 : vector<2x1xf32>
    %cst_94 = arith.constant 0.000000e+00 : f32
    %236 = vector.broadcast %cst_94 : f32 to vector<2x1xf32>
    %237 = arith.subf %236, %235 : vector<2x1xf32>
    %238 = math.exp %237 : vector<2x1xf32>
    %cst_95 = arith.constant 1.000000e+00 : f32
    %239 = vector.broadcast %cst_95 : f32 to vector<2x1xf32>
    %240 = arith.addf %239, %238 : vector<2x1xf32>
    %241 = math.log %240 : vector<2x1xf32>
    %cst_96 = arith.constant 0.000000e+00 : f32
    %242 = vector.broadcast %cst_96 : f32 to vector<2x1xf32>
    %243 = arith.subf %242, %231 : vector<2x1xf32>
    %cst_97 = arith.constant 0.000000e+00 : f32
    %244 = vector.broadcast %cst_97 : f32 to vector<2x1xf32>
    %245 = arith.maximumf %243, %244 : vector<2x1xf32>
    %246 = arith.addf %245, %241 : vector<2x1xf32>
    %cst_98 = arith.constant 0.000000e+00 : f32
    %247 = vector.broadcast %cst_98 : f32 to vector<2x1xf32>
    %248 = arith.maximumf %231, %247 : vector<2x1xf32>
    %249 = arith.addf %248, %241 : vector<2x1xf32>
    %250 = vector.broadcast %234 : vector<1x1xf32> to vector<2x1xf32>
    %251 = arith.mulf %250, %233 : vector<2x1xf32>
    %252 = arith.mulf %251, %246 : vector<2x1xf32>
    %cst_99 = arith.constant 1.000000e+00 : f32
    %253 = vector.broadcast %cst_99 : f32 to vector<2x1xf32>
    %254 = arith.subf %253, %233 : vector<2x1xf32>
    %255 = arith.mulf %254, %249 : vector<2x1xf32>
    %256 = arith.addf %252, %255 : vector<2x1xf32>
    %cst_100 = arith.constant dense<0.000000e+00> : vector<1xf32>
    %257 = vector.multi_reduction <add>, %256, %cst_100 [0] : vector<2x1xf32> to vector<1xf32>
    %258 = vector.shape_cast %257 : vector<1xf32> to vector<1x1xf32>
    %cst_101 = arith.constant 5.000000e-01 : f32
    %259 = vector.broadcast %cst_101 : f32 to vector<1x1xf32>
    %260 = arith.mulf %258, %259 : vector<1x1xf32>
    %c0_102 = arith.constant 0 : index
    %c0_103 = arith.constant 0 : index
    %261 = vector.load %arg25[%c0_102, %c0_103] : memref<1x1xf32, #tpu.memory_space<vmem>>, vector<1x1xf32>
    tpu.vector_store %arg25[%c0_102, %c0_103], %260 {strides = array<i32>} : memref<1x1xf32, #tpu.memory_space<vmem>>, vector<1x1xf32>,
    return
  }
}

</mosaic_0001>

<llo_original>
// kernel: biencoder_forward.1
$region0: #{biencoder_forward.1}
  #allocation0 [shape = 'u32[]', space=smem, size = 0x4, offset = 0x4, fixed_abs, tag = 'smem constant byte address 0x4 - core index']
  #allocation1 [shape = 'u32[144,128]{1,0:T(1,128)}', space=vmem, size = 0x12000, scoped, tag = 'internal scratch']
  #allocation2 [shape = 'f32[1,1]{1,0:T(1,128)S(1)}', space=vmem, size = 0x200, scoped, tag = 'scoped memory for biencoder_forward.1']
  %s0 = inlined_call_operand.vmem [shape: s32[32,1], index: 0, kind: input, shape index: {}]
  %s1 = inlined_call_operand.vmem [shape: s32[32,1], index: 1, kind: input, shape index: {}]
  %s2 = inlined_call_operand.vmem [shape: f32[4,8], index: 2, kind: input, shape index: {}]
  %s3 = inlined_call_operand.vmem [shape: f32[2,1], index: 3, kind: input, shape index: {}]
  %s4 = inlined_call_operand.<no memory space> [shape: f32[1,1], index: 4, kind: input, shape index: {}]
  %s5 = inlined_call_operand.vmem [shape: f32[64,32], index: 5, kind: input, shape index: {}]
  %s6 = inlined_call_operand.vmem [shape: f32[8,32], index: 6, kind: input, shape index: {}]
  %s7 = inlined_call_operand.vmem [shape: f32[2,32], index: 7, kind: input, shape index: {}]
  %s8 = inlined_call_operand.vmem [shape: f32[1,32], index: 8, kind: input, shape index: {}]
  %s9 = inlined_call_operand.vmem [shape: f32[1,32], index: 9, kind: input, shape index: {}]
  %s10 = inlined_call_operand.vmem [shape: f32[32,96], index: 10, kind: input, shape index: {}]
  %s11 = inlined_call_operand.vmem [shape: f32[1,96], index: 11, kind: input, shape index: {}]
  %s12 = inlined_call_operand.vmem [shape: f32[32,32], index: 12, kind: input, shape index: {}]
  %s13 = inlined_call_operand.vmem [shape: f32[1,32], index: 13, kind: input, shape index: {}]
  %s14 = inlined_call_operand.vmem [shape: f32[1,32], index: 14, kind: input, shape index: {}]
  %s15 = inlined_call_operand.vmem [shape: f32[1,32], index: 15, kind: input, shape index: {}]
  %s16 = inlined_call_operand.vmem [shape: f32[32,64], index: 16, kind: input, shape index: {}]
  %s17 = inlined_call_operand.vmem [shape: f32[1,64], index: 17, kind: input, shape index: {}]
  %s18 = inlined_call_operand.vmem [shape: f32[64,32], index: 18, kind: input, shape index: {}]
  %s19 = inlined_call_operand.vmem [shape: f32[1,32], index: 19, kind: input, shape index: {}]
  %s20 = inlined_call_operand.vmem [shape: f32[1,32], index: 20, kind: input, shape index: {}]
  %s21 = inlined_call_operand.vmem [shape: f32[1,32], index: 21, kind: input, shape index: {}]
  %s22 = inlined_call_operand.vmem [shape: f32[32,32], index: 22, kind: input, shape index: {}]
  %s23 = inlined_call_operand.vmem [shape: f32[1,32], index: 23, kind: input, shape index: {}]
  %s24 = inlined_call_operand.vmem [shape: f32[2,1], index: 24, kind: output, shape index: {0}]
  %s25 = inlined_call_operand.hbm [shape: f32[1,1], index: 25, kind: output, shape index: {1}]
  %26 = xla_tuple %s24, %s25
  %s27 = sld [smem:[#allocation0]]
  $region114: #{biencoder_forward.1} parent=0
    _
  %s29 = ssub.s32 1, %s27
  %s30 = scalar_select 0, %s29, %s27
  %v31 = vstv %s4
  %32 = vst [vmem:[#allocation2] sm:$0x1] %v31
  $region1: #{biencoder_forward.1} parent=0
    #allocation3 [shape = 'u8[512]{0}', space=vmem, size = 0x400, scoped, tag = 'output window, operand 1, single buffered']
    #allocation4 [shape = 's32[1]{0}', space=sflag, size = 0x4, scoped, tag = 'scoped memory for biencoder_forward.1']
    %33 = vsyncpa [#allocation4], 0
    // Predicated region
    $region2: #{biencoder_forward.1} parent=1 // pred_check
      _
    $region3: #{biencoder_forward.1} parent=1 // pred_check_branch
      %35 = sbr.rel (0) target = $region5
    $region4: #{biencoder_forward.1} parent=1 // pred_region
      _
    $region5: #{biencoder_forward.1} parent=1 // pred_fallthru
      _
    // Predicated region
    $region6: #{biencoder_forward.1} parent=1 // pred_check
      _
    $region7: #{biencoder_forward.1} parent=1 // pred_check_branch
      %37 = sbr.rel (0) target = $region9
    $region8: #{biencoder_forward.1} parent=1 // pred_region
      _
    $region9: #{biencoder_forward.1} parent=1 // pred_fallthru
      _
    // Predicated region
    $region10: #{biencoder_forward.1} parent=1 // pred_check
      _
    $region11: #{biencoder_forward.1} parent=1 // pred_check_branch
      %39 = sbr.rel (0) target = $region13
    $region12: #{biencoder_forward.1} parent=1 // pred_region
      _
    $region13: #{biencoder_forward.1} parent=1 // pred_fallthru
      _
    // Predicated region
    $region14: #{biencoder_forward.1} parent=1 // pred_check
      _
    $region15: #{biencoder_forward.1} parent=1 // pred_check_branch
      %41 = sbr.rel (0) target = $region17
    $region16: #{biencoder_forward.1} parent=1 // pred_region
      _
    $region17: #{biencoder_forward.1} parent=1 // pred_fallthru
      _
    // Predicated region
    $region18: #{biencoder_forward.1} parent=1 // pred_check
      _
    $region19: #{biencoder_forward.1} parent=1 // pred_check_branch
      %43 = sbr.rel (0) target = $region21
    $region20: #{biencoder_forward.1} parent=1 // pred_region
      _
    $region21: #{biencoder_forward.1} parent=1 // pred_fallthru
      _
    // Predicated region
    $region22: #{biencoder_forward.1} parent=1 // pred_check
      _
    $region23: #{biencoder_forward.1} parent=1 // pred_check_branch
      %45 = sbr.rel (0) target = $region25
    $region24: #{biencoder_forward.1} parent=1 // pred_region
      _
    $region25: #{biencoder_forward.1} parent=1 // pred_fallthru
      _
    // Predicated region
    $region26: #{biencoder_forward.1} parent=1 // pred_check
      _
    $region27: #{biencoder_forward.1} parent=1 // pred_check_branch
      %47 = sbr.rel (0) target = $region29
    $region28: #{biencoder_forward.1} parent=1 // pred_region
      _
    $region29: #{biencoder_forward.1} parent=1 // pred_fallthru
      _
    // Predicated region
    $region30: #{biencoder_forward.1} parent=1 // pred_check
      _
    $region31: #{biencoder_forward.1} parent=1 // pred_check_branch
      %49 = sbr.rel (0) target = $region33
    $region32: #{biencoder_forward.1} parent=1 // pred_region
      _
    $region33: #{biencoder_forward.1} parent=1 // pred_fallthru
      _
    // Predicated region
    $region34: #{biencoder_forward.1} parent=1 // pred_check
      _
    $region35: #{biencoder_forward.1} parent=1 // pred_check_branch
      %51 = sbr.rel (0) target = $region37
    $region36: #{biencoder_forward.1} parent=1 // pred_region
      _
    $region37: #{biencoder_forward.1} parent=1 // pred_fallthru
      _
    // Predicated region
    $region38: #{biencoder_forward.1} parent=1 // pred_check
      _
    $region39: #{biencoder_forward.1} parent=1 // pred_check_branch
      %53 = sbr.rel (0) target = $region41
    $region40: #{biencoder_forward.1} parent=1 // pred_region
      _
    $region41: #{biencoder_forward.1} parent=1 // pred_fallthru
      _
    // Predicated region
    $region42: #{biencoder_forward.1} parent=1 // pred_check
      _
    $region43: #{biencoder_forward.1} parent=1 // pred_check_branch
      %55 = sbr.rel (0) target = $region45
    $region44: #{biencoder_forward.1} parent=1 // pred_region
      _
    $region45: #{biencoder_forward.1} parent=1 // pred_fallthru
      _
    // Predicated region
    $region46: #{biencoder_forward.1} parent=1 // pred_check
      _
    $region47: #{biencoder_forward.1} parent=1 // pred_check_branch
      %57 = sbr.rel (0) target = $region49
    $region48: #{biencoder_forward.1} parent=1 // pred_region
      _
    $region49: #{biencoder_forward.1} parent=1 // pred_fallthru
      _
    // Predicated region
    $region50: #{biencoder_forward.1} parent=1 // pred_check
      _
    $region51: #{biencoder_forward.1} parent=1 // pred_check_branch
      %59 = sbr.rel (0) target = $region53
    $region52: #{biencoder_forward.1} parent=1 // pred_region
      _
    $region53: #{biencoder_forward.1} parent=1 // pred_fallthru
      _
    // Predicated region
    $region54: #{biencoder_forward.1} parent=1 // pred_check
      _
    $region55: #{biencoder_forward.1} parent=1 // pred_check_branch
      %61 = sbr.rel (0) target = $region57
    $region56: #{biencoder_forward.1} parent=1 // pred_region
      _
    $region57: #{biencoder_forward.1} parent=1 // pred_fallthru
      _
    // Predicated region
    $region58: #{biencoder_forward.1} parent=1 // pred_check
      _
    $region59: #{biencoder_forward.1} parent=1 // pred_check_branch
      %63 = sbr.rel (0) target = $region61
    $region60: #{biencoder_forward.1} parent=1 // pred_region
      _
    $region61: #{biencoder_forward.1} parent=1 // pred_fallthru
      _
    // Predicated region
    $region62: #{biencoder_forward.1} parent=1 // pred_check
      _
    $region63: #{biencoder_forward.1} parent=1 // pred_check_branch
      %65 = sbr.rel (0) target = $region65
    $region64: #{biencoder_forward.1} parent=1 // pred_region
      _
    $region65: #{biencoder_forward.1} parent=1 // pred_fallthru
      _
    // Predicated region
    $region66: #{biencoder_forward.1} parent=1 // pred_check
      _
    $region67: #{biencoder_forward.1} parent=1 // pred_check_branch
      %67 = sbr.rel (0) target = $region69
    $region68: #{biencoder_forward.1} parent=1 // pred_region
      _
    $region69: #{biencoder_forward.1} parent=1 // pred_fallthru
      _
    // Predicated region
    $region70: #{biencoder_forward.1} parent=1 // pred_check
      _
    $region71: #{biencoder_forward.1} parent=1 // pred_check_branch
      %69 = sbr.rel (0) target = $region73
    $region72: #{biencoder_forward.1} parent=1 // pred_region
      _
    $region73: #{biencoder_forward.1} parent=1 // pred_fallthru
      _
    // Predicated region
    $region74: #{biencoder_forward.1} parent=1 // pred_check
      _
    $region75: #{biencoder_forward.1} parent=1 // pred_check_branch
      %71 = sbr.rel (0) target = $region77
    $region76: #{biencoder_forward.1} parent=1 // pred_region
      _
    $region77: #{biencoder_forward.1} parent=1 // pred_fallthru
      _
    // Predicated region
    $region78: #{biencoder_forward.1} parent=1 // pred_check
      _
    $region79: #{biencoder_forward.1} parent=1 // pred_check_branch
      %73 = sbr.rel (0) target = $region81
    $region80: #{biencoder_forward.1} parent=1 // pred_region
      _
    $region81: #{biencoder_forward.1} parent=1 // pred_fallthru
      _
    // Predicated region
    $region82: #{biencoder_forward.1} parent=1 // pred_check
      _
    $region83: #{biencoder_forward.1} parent=1 // pred_check_branch
      %75 = sbr.rel (0) target = $region85
    $region84: #{biencoder_forward.1} parent=1 // pred_region
      _
    $region85: #{biencoder_forward.1} parent=1 // pred_fallthru
      _
    // Predicated region
    $region86: #{biencoder_forward.1} parent=1 // pred_check
      _
    $region87: #{biencoder_forward.1} parent=1 // pred_check_branch
      %77 = sbr.rel (0) target = $region89
    $region88: #{biencoder_forward.1} parent=1 // pred_region
      _
    $region89: #{biencoder_forward.1} parent=1 // pred_fallthru
      _
    // Predicated region
    $region90: #{biencoder_forward.1} parent=1 // pred_check
      _
    $region91: #{biencoder_forward.1} parent=1 // pred_check_branch
      %79 = sbr.rel (0) target = $region93
    $region92: #{biencoder_forward.1} parent=1 // pred_region
      _
    $region93: #{biencoder_forward.1} parent=1 // pred_fallthru
      _
    // Predicated region
    $region94: #{biencoder_forward.1} parent=1 // pred_check
      _
    $region95: #{biencoder_forward.1} parent=1 // pred_check_branch
      %81 = sbr.rel (0) target = $region97
    $region96: #{biencoder_forward.1} parent=1 // pred_region
      _
    $region97: #{biencoder_forward.1} parent=1 // pred_fallthru
      _
    %v82 = vld [vmem:[%s0] sm:$0xff]
    %v83 = vld [vmem:[%s0 + $0x8] sm:$0xff]
    %v84 = vld [vmem:[%s0 + $0x10] sm:$0xff]
    %v85 = vld [vmem:[%s0 + $0x18] sm:$0xff]
    %v86 = vlaneseq
    %v87 = vand.u32 %v86, 127
    %88 = vset.pattern.permute.xlu0 0
    %89 = vperm.xlu0 %88, %v82
    %v90 = vpop.permute.xlu0 %89
    %91 = vset.pattern.permute.xlu0 0
    %92 = vperm.xlu0 %91, %v83
    %v93 = vpop.permute.xlu0 %92
    %94 = vset.pattern.permute.xlu0 0
    %95 = vperm.xlu0 %94, %v84
    %v96 = vpop.permute.xlu0 %95
    %97 = vset.pattern.permute.xlu0 0
    %98 = vperm.xlu0 %97, %v85
    %v99 = vpop.permute.xlu0 %98
    %vm100 = vcmp.eq.s32.totalorder %v87, %v90
    %vm101 = vcmp.eq.s32.totalorder %v87, %v93
    %vm102 = vcmp.eq.s32.totalorder %v87, %v96
    %vm103 = vcmp.eq.s32.totalorder %v87, %v99
    %v104 = vsel %vm100, 1, 0
    %v105 = vsel %vm101, 1, 0
    %v106 = vsel %vm102, 1, 0
    %v107 = vsel %vm103, 1, 0
    %v108 = vcvt.s32.f32 %v104
    %v109 = vcvt.s32.f32 %v105
    %v110 = vcvt.s32.f32 %v106
    %v111 = vcvt.s32.f32 %v107
    %v112 = vld [vmem:[%s5] sm:$0xff]
    %v113 = vld [vmem:[%s5 + $0x8] sm:$0xff]
    %v114 = vld [vmem:[%s5 + $0x10] sm:$0xff]
    %v115 = vld [vmem:[%s5 + $0x18] sm:$0xff]
    %v116 = vld [vmem:[%s5 + $0x20] sm:$0xff]
    %v117 = vld [vmem:[%s5 + $0x28] sm:$0xff]
    %v118 = vld [vmem:[%s5 + $0x30] sm:$0xff]
    %v119 = vld [vmem:[%s5 + $0x38] sm:$0xff]
    %v120 = vld [vmem:[%s6] sm:$0xff]
    %vm121 = vcmask 523264
    %v123 = vsel %vm121, %v108, 0
    %v126 = vsel %vm121, %v109, 0
    %v129 = vsel %vm121, %v110, 0
    %v132 = vsel %vm121, %v111, 0
    %134 = vmatprep.subr.mxu0 0.0
    %135 = vmatpush1.msra.mxu0 %v112
    %136 = vmatprep.subr.mxu0 0.0
    %137 = vmatpush1.msra.mxu0 %v113
    %138 = vmatprep.subr.mxu0 0.0
    %139 = vmatpush1.msra.mxu0 %v114
    %140 = vmatprep.subr.mxu0 0.0
    %141 = vmatpush1.msra.mxu0 %v115
    %142 = vmatprep.subr.mxu0 0.0
    %143 = vmatpush1.msra.mxu0 %v116
    %144 = vmatprep.subr.mxu0 0.0
    %145 = vmatpush1.msra.mxu0 %v117
    %146 = vmatprep.subr.mxu0 0.0
    %147 = vmatpush1.msra.mxu0 %v118
    %148 = vmatprep.subr.mxu0 0.0
    %149 = vmatpush1.msra.mxu0 %v119
    %150 = vmatprep.subr.mxu0 0.0
    %151 = vmatpush1.msra.mxu0 0.0
    %152 = vmatprep.subr.mxu0 0.0
    %153 = vmatpush1.msra.mxu0 0.0
    %154 = vmatprep.subr.mxu0 0.0
    %155 = vmatpush1.msra.mxu0 0.0
    %156 = vmatprep.subr.mxu0 0.0
    %157 = vmatpush1.msra.mxu0 0.0
    %158 = vmatprep.subr.mxu0 0.0
    %159 = vmatpush1.msra.mxu0 0.0
    %160 = vmatprep.subr.mxu0 0.0
    %161 = vmatpush1.msra.mxu0 0.0
    %162 = vmatprep.subr.mxu0 0.0
    %163 = vmatpush1.msra.mxu0 0.0
    %164 = vmatprep.subr.mxu0 0.0
    %165 = vmatpush1.msra.mxu0 0.0
    %166 = vmatprep.subr.mxu0 0.0
    %167 = vmatpush1.msra.mxu0 0.0
    %168 = vmatprep.subr.mxu0 0.0
    %169 = vmatpush1.msra.mxu0 0.0
    %170 = vmatprep.subr.mxu0 0.0
    %171 = vmatpush1.msra.mxu0 0.0
    %172 = vmatprep.subr.mxu0 0.0
    %173 = vmatpush1.msra.mxu0 0.0
    %174 = vmatprep.subr.mxu0 0.0
    %175 = vmatpush1.msra.mxu0 0.0
    %176 = vmatprep.subr.mxu0 0.0
    %177 = vmatpush1.msra.mxu0 0.0
    %178 = vmatprep.subr.mxu0 0.0
    %179 = vmatpush1.msra.mxu0 0.0
    %180 = vmatprep.subr.mxu0 0.0
    %181 = vmatpush1.msra.mxu0 0.0
    %182 = vmatprep.subr.mxu0 0.0
    %183 = vmatpush1.msra.mxu0 0.0
    %184 = vmatprep.subr.mxu0 0.0
    %185 = vmatpush1.msra.mxu0 0.0
    %186 = vmatprep.subr.mxu0 0.0
    %187 = vmatpush1.msra.mxu0 0.0
    %188 = vmatprep.subr.mxu0 0.0
    %189 = vmatpush1.msra.mxu0 0.0
    %190 = vmatprep.subr.mxu0 0.0
    %191 = vmatpush1.msra.mxu0 0.0
    %192 = vmatprep.subr.mxu0 0.0
    %193 = vmatpush1.msra.mxu0 0.0
    %194 = vmatprep.subr.mxu0 0.0
    %195 = vmatpush1.msra.mxu0 0.0
    %196 = vmatprep.subr.mxu0 0.0
    %197 = vmatpush1.msra.mxu0 0.0
    %198 = vmatprep.mubr.f32.mxu0 0.0
    %199 = vmatmul.mubr.f32.gmra.mrb[0].mxu0 %v123
    %v200 = vpop.f32.mrb[0].mxu0
    %v201 = vadd.f32 %v120, %v200
    %v202 = vpop.f32.mrb[0].mxu0
    %203 = vmatprep.mubr.f32.mxu0 0.0
    %204 = vmatmul.mubr.f32.gmra.mrb[0].mxu0 %v126
    %v205 = vpop.f32.mrb[0].mxu0
    %v206 = vadd.f32 %v120, %v205
    %v207 = vpop.f32.mrb[0].mxu0
    %208 = vmatprep.mubr.f32.mxu0 0.0
    %209 = vmatmul.mubr.f32.gmra.mrb[0].mxu0 %v129
    %v210 = vpop.f32.mrb[0].mxu0
    %v211 = vadd.f32 %v120, %v210
    %v212 = vpop.f32.mrb[0].mxu0
    %213 = vmatprep.mubr.f32.mxu0 0.0
    %214 = vmatmul.mubr.f32.gmra.mrb[0].mxu0 %v132
    %v215 = vpop.f32.mrb[0].mxu0
    %v216 = vadd.f32 %v120, %v215
    %v217 = vpop.f32.mrb[0].mxu0
    %218 = vdwg.mxu0
    %v219 = vld [vmem:[%s7] sm:$0x3]
    %v220 = vld [vmem:[%s1] sm:$0xff]
    %v221 = vld [vmem:[%s1 + $0x8] sm:$0xff]
    %v222 = vld [vmem:[%s1 + $0x10] sm:$0xff]
    %v223 = vld [vmem:[%s1 + $0x18] sm:$0xff]
    %vm224 = vcmp.gt.s32.totalorder %v220, 0
    %vm225 = vcmp.gt.s32.totalorder %v221, 0
    %vm226 = vcmp.gt.s32.totalorder %v222, 0
    %vm227 = vcmp.gt.s32.totalorder %v223, 0
    %v228 = vsel %vm224, 1, 0
    %v229 = vsel %vm225, 1, 0
    %v230 = vsel %vm226, 1, 0
    %v231 = vsel %vm227, 1, 0
    %232 = vset.pattern.permute.xlu0 0
    %233 = vperm.xlu0 %232, %v228
    %v234 = vpop.permute.xlu0 %233
    %235 = vset.pattern.permute.xlu0 0
    %236 = vperm.xlu0 %235, %v229
    %v237 = vpop.permute.xlu0 %236
    %238 = vset.pattern.permute.xlu0 0
    %239 = vperm.xlu0 %238, %v230
    %v240 = vpop.permute.xlu0 %239
    %241 = vset.pattern.permute.xlu0 0
    %242 = vperm.xlu0 %241, %v231
    %v243 = vpop.permute.xlu0 %242
    %vm244 = vcmp.eq.s32.totalorder %v234, 1
    %vm245 = vcmp.eq.s32.totalorder %v237, 1
    %vm246 = vcmp.eq.s32.totalorder %v240, 1
    %vm247 = vcmp.eq.s32.totalorder %v243, 1
    %v248 = vlaneseq
    %v249 = vshrl.u32 %v248, 7
    %v250 = vsub.s32 1, %v249
    %v251 = vrot.slane %v219, %v250
    %v252 = vlaneseq
    %v253 = vshrl.u32 %v252, 7
    %v254 = vsub.s32 0, %v253
    %v255 = vrot.slane %v219, %v254
    %v256 = vsel %vm244, %v251, %v255
    %v257 = vsel %vm245, %v251, %v255
    %v258 = vsel %vm246, %v251, %v255
    %v259 = vsel %vm247, %v251, %v255
    %v260 = vadd.f32 %v201, %v256
    %v261 = vadd.f32 %v206, %v257
    %v262 = vadd.f32 %v211, %v258
    %v263 = vadd.f32 %v216, %v259
    %v264 = vld [vmem:[%s8] sm:$0x1]
    %v265 = vld [vmem:[%s9] sm:$0x1]
    %vm266 = vcmask 261120
    %v267 = vsel %vm266, %v260, 0.0
    %268 = vadd.xlane.f32.xlu0 %v267
    %v269 = vpop.xlane.xlu0 %268
    %v270 = vsel %vm266, %v261, 0.0
    %271 = vadd.xlane.f32.xlu0 %v270
    %v272 = vpop.xlane.xlu0 %271
    %v273 = vsel %vm266, %v262, 0.0
    %274 = vadd.xlane.f32.xlu0 %v273
    %v275 = vpop.xlane.xlu0 %274
    %v276 = vsel %vm266, %v263, 0.0
    %277 = vadd.xlane.f32.xlu0 %v276
    %v278 = vpop.xlane.xlu0 %277
    %v279 = vrcp.pop 32.0
    %v280 = vmul.f32 %v269, %v279
    %v281 = vmul.f32 %v272, %v279
    %v282 = vmul.f32 %v275, %v279
    %v283 = vmul.f32 %v278, %v279
    %v284 = vsub.f32 %v260, %v280
    %v285 = vsub.f32 %v261, %v281
    %v286 = vsub.f32 %v262, %v282
    %v287 = vsub.f32 %v263, %v283
    %v288 = vmul.f32 %v284, %v284
    %v289 = vmul.f32 %v285, %v285
    %v290 = vmul.f32 %v286, %v286
    %v291 = vmul.f32 %v287, %v287
    %v292 = vsel %vm266, %v288, 0.0
    %293 = vadd.xlane.f32.xlu0 %v292
    %v294 = vpop.xlane.xlu0 %293
    %v295 = vsel %vm266, %v289, 0.0
    %296 = vadd.xlane.f32.xlu0 %v295
    %v297 = vpop.xlane.xlu0 %296
    %v298 = vsel %vm266, %v290, 0.0
    %299 = vadd.xlane.f32.xlu0 %v298
    %v300 = vpop.xlane.xlu0 %299
    %v301 = vsel %vm266, %v291, 0.0
    %302 = vadd.xlane.f32.xlu0 %v301
    %v303 = vpop.xlane.xlu0 %302
    %v304 = vmul.f32 %v294, %v279
    %v305 = vmul.f32 %v297, %v279
    %v306 = vmul.f32 %v300, %v279
    %v307 = vmul.f32 %v303, %v279
    %v308 = vadd.f32 %v304, 1e-12
    %v309 = vadd.f32 %v305, 1e-12
    %v310 = vadd.f32 %v306, 1e-12
    %v311 = vadd.f32 %v307, 1e-12
    %v312 = vrsqrt.pop %v308
    %v313 = vrsqrt.pop %v309
    %v314 = vrsqrt.pop %v310
    %v315 = vrsqrt.pop %v311
    %v316 = vmul.f32 %v284, %v312
    %v317 = vmul.f32 %v285, %v313
    %v318 = vmul.f32 %v286, %v314
    %v319 = vmul.f32 %v287, %v315
    %v321 = vlaneseq
    %v322 = vshrl.u32 %v321, 7
    %v323 = vsub.s32 0, %v322
    %v324 = vrot.slane %v264, %v323
    %v326 = vmul.f32 %v316, %v324
    %v327 = vmul.f32 %v317, %v324
    %v328 = vmul.f32 %v318, %v324
    %v329 = vmul.f32 %v319, %v324
    %v331 = vlaneseq
    %v332 = vshrl.u32 %v331, 7
    %v333 = vsub.s32 0, %v332
    %v334 = vrot.slane %v265, %v333
    %v336 = vadd.f32 %v326, %v334
    %v337 = vadd.f32 %v327, %v334
    %v338 = vadd.f32 %v328, %v334
    %v339 = vadd.f32 %v329, %v334
    %v340 = vld [vmem:[%s10] sm:$0xff]
    %v341 = vld [vmem:[%s10 + $0x8] sm:$0xff]
    %v342 = vld [vmem:[%s10 + $0x10] sm:$0xff]
    %v343 = vld [vmem:[%s10 + $0x18] sm:$0xff]
    %v344 = vld [vmem:[%s11] sm:$0x1]
    %v346 = vlaneseq
    %v347 = vshrl.u32 %v346, 7
    %v348 = vsub.s32 0, %v347
    %v349 = vrot.slane %v344, %v348
    %v352 = vsel %vm266, %v336, 0
    %v355 = vsel %vm266, %v337, 0
    %v358 = vsel %vm266, %v338, 0
    %v361 = vsel %vm266, %v339, 0
    %363 = vmatprep.subr.mxu0 0.0
    %364 = vmatpush1.msra.mxu0 %v340
    %365 = vmatprep.subr.mxu0 0.0
    %366 = vmatpush1.msra.mxu0 %v341
    %367 = vmatprep.subr.mxu0 0.0
    %368 = vmatpush1.msra.mxu0 %v342
    %369 = vmatprep.subr.mxu0 0.0
    %370 = vmatpush1.msra.mxu0 %v343
    %371 = vmatprep.subr.mxu0 0.0
    %372 = vmatpush1.msra.mxu0 0.0
    %373 = vmatprep.subr.mxu0 0.0
    %374 = vmatpush1.msra.mxu0 0.0
    %375 = vmatprep.subr.mxu0 0.0
    %376 = vmatpush1.msra.mxu0 0.0
    %377 = vmatprep.subr.mxu0 0.0
    %378 = vmatpush1.msra.mxu0 0.0
    %379 = vmatprep.subr.mxu0 0.0
    %380 = vmatpush1.msra.mxu0 0.0
    %381 = vmatprep.subr.mxu0 0.0
    %382 = vmatpush1.msra.mxu0 0.0
    %383 = vmatprep.subr.mxu0 0.0
    %384 = vmatpush1.msra.mxu0 0.0
    %385 = vmatprep.subr.mxu0 0.0
    %386 = vmatpush1.msra.mxu0 0.0
    %387 = vmatprep.subr.mxu0 0.0
    %388 = vmatpush1.msra.mxu0 0.0
    %389 = vmatprep.subr.mxu0 0.0
    %390 = vmatpush1.msra.mxu0 0.0
    %391 = vmatprep.subr.mxu0 0.0
    %392 = vmatpush1.msra.mxu0 0.0
    %393 = vmatprep.subr.mxu0 0.0
    %394 = vmatpush1.msra.mxu0 0.0
    %395 = vmatprep.subr.mxu0 0.0
    %396 = vmatpush1.msra.mxu0 0.0
    %397 = vmatprep.subr.mxu0 0.0
    %398 = vmatpush1.msra.mxu0 0.0
    %399 = vmatprep.subr.mxu0 0.0
    %400 = vmatpush1.msra.mxu0 0.0
    %401 = vmatprep.subr.mxu0 0.0
    %402 = vmatpush1.msra.mxu0 0.0
    %403 = vmatprep.subr.mxu0 0.0
    %404 = vmatpush1.msra.mxu0 0.0
    %405 = vmatprep.subr.mxu0 0.0
    %406 = vmatpush1.msra.mxu0 0.0
    %407 = vmatprep.subr.mxu0 0.0
    %408 = vmatpush1.msra.mxu0 0.0
    %409 = vmatprep.subr.mxu0 0.0
    %410 = vmatpush1.msra.mxu0 0.0
    %411 = vmatprep.subr.mxu0 0.0
    %412 = vmatpush1.msra.mxu0 0.0
    %413 = vmatprep.subr.mxu0 0.0
    %414 = vmatpush1.msra.mxu0 0.0
    %415 = vmatprep.subr.mxu0 0.0
    %416 = vmatpush1.msra.mxu0 0.0
    %417 = vmatprep.subr.mxu0 0.0
    %418 = vmatpush1.msra.mxu0 0.0
    %419 = vmatprep.subr.mxu0 0.0
    %420 = vmatpush1.msra.mxu0 0.0
    %421 = vmatprep.subr.mxu0 0.0
    %422 = vmatpush1.msra.mxu0 0.0
    %423 = vmatprep.subr.mxu0 0.0
    %424 = vmatpush1.msra.mxu0 0.0
    %425 = vmatprep.subr.mxu0 0.0
    %426 = vmatpush1.msra.mxu0 0.0
    %427 = vmatprep.mubr.f32.mxu0 0.0
    %428 = vmatmul.mubr.f32.gmra.mrb[0].mxu0 %v352
    %v429 = vpop.f32.mrb[0].mxu0
    %v430 = vadd.f32 %v349, %v429
    %v431 = vpop.f32.mrb[0].mxu0
    %432 = vmatprep.mubr.f32.mxu0 0.0
    %433 = vmatmul.mubr.f32.gmra.mrb[0].mxu0 %v355
    %v434 = vpop.f32.mrb[0].mxu0
    %v435 = vadd.f32 %v349, %v434
    %v436 = vpop.f32.mrb[0].mxu0
    %437 = vmatprep.mubr.f32.mxu0 0.0
    %438 = vmatmul.mubr.f32.gmra.mrb[0].mxu0 %v358
    %v439 = vpop.f32.mrb[0].mxu0
    %v440 = vadd.f32 %v349, %v439
    %v441 = vpop.f32.mrb[0].mxu0
    %442 = vmatprep.mubr.f32.mxu0 0.0
    %443 = vmatmul.mubr.f32.gmra.mrb[0].mxu0 %v361
    %v444 = vpop.f32.mrb[0].mxu0
    %v445 = vadd.f32 %v349, %v444
    %v446 = vpop.f32.mrb[0].mxu0
    %447 = vdwg.mxu0
    %v448 = vld [vmem:[%s2] sm:$0xf]
    %450 = vrot.lane.b32.xlu0 %v430, 96
    %v451 = vpop.permute.xlu0 %450
    %v452 = vsel %vm266, %v430, 0
    %v454 = vsel %vm266, %v451, 0
    %456 = vmatprep.subr.mxu0 0.0
    %457 = vmatpush1.xpose.msra.mxu0 %v454
    %458 = vmatprep.subr.mxu0 0.0
    %459 = vmatpush1.xpose.msra.mxu0 0.0
    %460 = vmatprep.subr.mxu0 0.0
    %461 = vmatpush1.xpose.msra.mxu0 0.0
    %462 = vmatprep.subr.mxu0 0.0
    %463 = vmatpush1.xpose.msra.mxu0 0.0
    %464 = vmatprep.subr.mxu0 0.0
    %465 = vmatpush1.xpose.msra.mxu0 0.0
    %466 = vmatprep.subr.mxu0 0.0
    %467 = vmatpush1.xpose.msra.mxu0 0.0
    %468 = vmatprep.subr.mxu0 0.0
    %469 = vmatpush1.xpose.msra.mxu0 0.0
    %470 = vmatprep.subr.mxu0 0.0
    %471 = vmatpush1.xpose.msra.mxu0 0.0
    %472 = vmatprep.subr.mxu0 0.0
    %473 = vmatpush1.xpose.msra.mxu0 0.0
    %474 = vmatprep.subr.mxu0 0.0
    %475 = vmatpush1.xpose.msra.mxu0 0.0
    %476 = vmatprep.subr.mxu0 0.0
    %477 = vmatpush1.xpose.msra.mxu0 0.0
    %478 = vmatprep.subr.mxu0 0.0
    %479 = vmatpush1.xpose.msra.mxu0 0.0
    %480 = vmatprep.subr.mxu0 0.0
    %481 = vmatpush1.xpose.msra.mxu0 0.0
    %482 = vmatprep.subr.mxu0 0.0
    %483 = vmatpush1.xpose.msra.mxu0 0.0
    %484 = vmatprep.subr.mxu0 0.0
    %485 = vmatpush1.xpose.msra.mxu0 0.0
    %486 = vmatprep.subr.mxu0 0.0
    %487 = vmatpush1.xpose.msra.mxu0 0.0
    %488 = vmatprep.subr.mxu0 0.0
    %489 = vmatpush1.xpose.msra.mxu0 0.0
    %490 = vmatprep.subr.mxu0 0.0
    %491 = vmatpush1.xpose.msra.mxu0 0.0
    %492 = vmatprep.subr.mxu0 0.0
    %493 = vmatpush1.xpose.msra.mxu0 0.0
    %494 = vmatprep.subr.mxu0 0.0
    %495 = vmatpush1.xpose.msra.mxu0 0.0
    %496 = vmatprep.subr.mxu0 0.0
    %497 = vmatpush1.xpose.msra.mxu0 0.0
    %498 = vmatprep.subr.mxu0 0.0
    %499 = vmatpush1.xpose.msra.mxu0 0.0
    %500 = vmatprep.subr.mxu0 0.0
    %501 = vmatpush1.xpose.msra.mxu0 0.0
    %502 = vmatprep.subr.mxu0 0.0
    %503 = vmatpush1.xpose.msra.mxu0 0.0
    %504 = vmatprep.subr.mxu0 0.0
    %505 = vmatpush1.xpose.msra.mxu0 0.0
    %506 = vmatprep.subr.mxu0 0.0
    %507 = vmatpush1.xpose.msra.mxu0 0.0
    %508 = vmatprep.subr.mxu0 0.0
    %509 = vmatpush1.xpose.msra.mxu0 0.0
    %510 = vmatprep.subr.mxu0 0.0
    %511 = vmatpush1.xpose.msra.mxu0 0.0
    %512 = vmatprep.subr.mxu0 0.0
    %513 = vmatpush1.xpose.msra.mxu0 0.0
    %514 = vmatprep.subr.mxu0 0.0
    %515 = vmatpush1.xpose.msra.mxu0 0.0
    %516 = vmatprep.subr.mxu0 0.0
    %517 = vmatpush1.xpose.msra.mxu0 0.0
    %518 = vmatprep.subr.mxu0 0.0
    %519 = vmatpush1.xpose.msra.mxu0 0.0
    %520 = vmatprep.mubr.f32.mxu0 0.0
    %521 = vmatmul.mubr.f32.gmra.mrb[0].mxu0 %v452
    %v522 = vpop.f32.mrb[0].mxu0
    %v523 = vadd.f32 0.0, %v522
    %v524 = vpop.f32.mrb[0].mxu0
    %525 = vdwg.mxu0
    %v526 = vmul.f32 %v523, 0.17677669
    %v527 = vlaneseq
    %v528 = vshrl.u32 %v527, 7
    %v529 = vsub.s32 0, %v528
    %v530 = vrot.slane %v448, %v529
    %v531 = vadd.f32 %v526, %v530
    %vm532 = vcmask 64512
    %v533 = vsel %vm532, %v531, -inf
    %534 = vmax.xlane.f32.xlu0 %v533
    %v535 = vpop.xlane.xlu0 %534
    %v536 = vsub.f32 %v531, %v535
    %v537 = vmul.f32 %v536, 1.442695
    %v538 = vpow.pop %v537
    %v539 = vsel %vm532, %v538, 0.0
    %540 = vadd.xlane.f32.xlu0 %v539
    %v541 = vpop.xlane.xlu0 %540
    %v542 = vrcp.pop %v541
    %v543 = vmul.f32 %v538, %v542
    %544 = vrot.lane.b32.xlu0 %v430, 64
    %v545 = vpop.permute.xlu0 %544
    %v548 = vsel %vm532, %v543, 0
    %550 = vmatprep.subr.mxu0 0.0
    %551 = vmatpush1.msra.mxu0 %v545
    %552 = vmatprep.subr.mxu0 0.0
    %553 = vmatpush1.msra.mxu0 0.0
    %554 = vmatprep.subr.mxu0 0.0
    %555 = vmatpush1.msra.mxu0 0.0
    %556 = vmatprep.subr.mxu0 0.0
    %557 = vmatpush1.msra.mxu0 0.0
    %558 = vmatprep.subr.mxu0 0.0
    %559 = vmatpush1.msra.mxu0 0.0
    %560 = vmatprep.subr.mxu0 0.0
    %561 = vmatpush1.msra.mxu0 0.0
    %562 = vmatprep.subr.mxu0 0.0
    %563 = vmatpush1.msra.mxu0 0.0
    %564 = vmatprep.subr.mxu0 0.0
    %565 = vmatpush1.msra.mxu0 0.0
    %566 = vmatprep.subr.mxu0 0.0
    %567 = vmatpush1.msra.mxu0 0.0
    %568 = vmatprep.subr.mxu0 0.0
    %569 = vmatpush1.msra.mxu0 0.0
    %570 = vmatprep.subr.mxu0 0.0
    %571 = vmatpush1.msra.mxu0 0.0
    %572 = vmatprep.subr.mxu0 0.0
    %573 = vmatpush1.msra.mxu0 0.0
    %574 = vmatprep.subr.mxu0 0.0
    %575 = vmatpush1.msra.mxu0 0.0
    %576 = vmatprep.subr.mxu0 0.0
    %577 = vmatpush1.msra.mxu0 0.0
    %578 = vmatprep.subr.mxu0 0.0
    %579 = vmatpush1.msra.mxu0 0.0
    %580 = vmatprep.subr.mxu0 0.0
    %581 = vmatpush1.msra.mxu0 0.0
    %582 = vmatprep.subr.mxu0 0.0
    %583 = vmatpush1.msra.mxu0 0.0
    %584 = vmatprep.subr.mxu0 0.0
    %585 = vmatpush1.msra.mxu0 0.0
    %586 = vmatprep.subr.mxu0 0.0
    %587 = vmatpush1.msra.mxu0 0.0
    %588 = vmatprep.subr.mxu0 0.0
    %589 = vmatpush1.msra.mxu0 0.0
    %590 = vmatprep.subr.mxu0 0.0
    %591 = vmatpush1.msra.mxu0 0.0
    %592 = vmatprep.subr.mxu0 0.0
    %593 = vmatpush1.msra.mxu0 0.0
    %594 = vmatprep.subr.mxu0 0.0
    %595 = vmatpush1.msra.mxu0 0.0
    %596 = vmatprep.subr.mxu0 0.0
    %597 = vmatpush1.msra.mxu0 0.0
    %598 = vmatprep.subr.mxu0 0.0
    %599 = vmatpush1.msra.mxu0 0.0
    %600 = vmatprep.subr.mxu0 0.0
    %601 = vmatpush1.msra.mxu0 0.0
    %602 = vmatprep.subr.mxu0 0.0
    %603 = vmatpush1.msra.mxu0 0.0
    %604 = vmatprep.subr.mxu0 0.0
    %605 = vmatpush1.msra.mxu0 0.0
    %606 = vmatprep.subr.mxu0 0.0
    %607 = vmatpush1.msra.mxu0 0.0
    %608 = vmatprep.subr.mxu0 0.0
    %609 = vmatpush1.msra.mxu0 0.0
    %610 = vmatprep.subr.mxu0 0.0
    %611 = vmatpush1.msra.mxu0 0.0
    %612 = vmatprep.subr.mxu0 0.0
    %613 = vmatpush1.msra.mxu0 0.0
    %614 = vmatprep.mubr.f32.mxu0 0.0
    %615 = vmatmul.mubr.f32.gmra.mrb[0].mxu0 %v548
    %v616 = vpop.f32.mrb[0].mxu0
    %v617 = vadd.f32 0.0, %v616
    %v618 = vpop.f32.mrb[0].mxu0
    %619 = vdwg.mxu0
    %621 = vrot.lane.b32.xlu0 %v435, 96
    %v622 = vpop.permute.xlu0 %621
    %v623 = vsel %vm266, %v435, 0
    %v625 = vsel %vm266, %v622, 0
    %627 = vmatprep.subr.mxu0 0.0
    %628 = vmatpush1.xpose.msra.mxu0 %v625
    %629 = vmatprep.subr.mxu0 0.0
    %630 = vmatpush1.xpose.msra.mxu0 0.0
    %631 = vmatprep.subr.mxu0 0.0
    %632 = vmatpush1.xpose.msra.mxu0 0.0
    %633 = vmatprep.subr.mxu0 0.0
    %634 = vmatpush1.xpose.msra.mxu0 0.0
    %635 = vmatprep.subr.mxu0 0.0
    %636 = vmatpush1.xpose.msra.mxu0 0.0
    %637 = vmatprep.subr.mxu0 0.0
    %638 = vmatpush1.xpose.msra.mxu0 0.0
    %639 = vmatprep.subr.mxu0 0.0
    %640 = vmatpush1.xpose.msra.mxu0 0.0
    %641 = vmatprep.subr.mxu0 0.0
    %642 = vmatpush1.xpose.msra.mxu0 0.0
    %643 = vmatprep.subr.mxu0 0.0
    %644 = vmatpush1.xpose.msra.mxu0 0.0
    %645 = vmatprep.subr.mxu0 0.0
    %646 = vmatpush1.xpose.msra.mxu0 0.0
    %647 = vmatprep.subr.mxu0 0.0
    %648 = vmatpush1.xpose.msra.mxu0 0.0
    %649 = vmatprep.subr.mxu0 0.0
    %650 = vmatpush1.xpose.msra.mxu0 0.0
    %651 = vmatprep.subr.mxu0 0.0
    %652 = vmatpush1.xpose.msra.mxu0 0.0
    %653 = vmatprep.subr.mxu0 0.0
    %654 = vmatpush1.xpose.msra.mxu0 0.0
    %655 = vmatprep.subr.mxu0 0.0
    %656 = vmatpush1.xpose.msra.mxu0 0.0
    %657 = vmatprep.subr.mxu0 0.0
    %658 = vmatpush1.xpose.msra.mxu0 0.0
    %659 = vmatprep.subr.mxu0 0.0
    %660 = vmatpush1.xpose.msra.mxu0 0.0
    %661 = vmatprep.subr.mxu0 0.0
    %662 = vmatpush1.xpose.msra.mxu0 0.0
    %663 = vmatprep.subr.mxu0 0.0
    %664 = vmatpush1.xpose.msra.mxu0 0.0
    %665 = vmatprep.subr.mxu0 0.0
    %666 = vmatpush1.xpose.msra.mxu0 0.0
    %667 = vmatprep.subr.mxu0 0.0
    %668 = vmatpush1.xpose.msra.mxu0 0.0
    %669 = vmatprep.subr.mxu0 0.0
    %670 = vmatpush1.xpose.msra.mxu0 0.0
    %671 = vmatprep.subr.mxu0 0.0
    %672 = vmatpush1.xpose.msra.mxu0 0.0
    %673 = vmatprep.subr.mxu0 0.0
    %674 = vmatpush1.xpose.msra.mxu0 0.0
    %675 = vmatprep.subr.mxu0 0.0
    %676 = vmatpush1.xpose.msra.mxu0 0.0
    %677 = vmatprep.subr.mxu0 0.0
    %678 = vmatpush1.xpose.msra.mxu0 0.0
    %679 = vmatprep.subr.mxu0 0.0
    %680 = vmatpush1.xpose.msra.mxu0 0.0
    %681 = vmatprep.subr.mxu0 0.0
    %682 = vmatpush1.xpose.msra.mxu0 0.0
    %683 = vmatprep.subr.mxu0 0.0
    %684 = vmatpush1.xpose.msra.mxu0 0.0
    %685 = vmatprep.subr.mxu0 0.0
    %686 = vmatpush1.xpose.msra.mxu0 0.0
    %687 = vmatprep.subr.mxu0 0.0
    %688 = vmatpush1.xpose.msra.mxu0 0.0
    %689 = vmatprep.subr.mxu0 0.0
    %690 = vmatpush1.xpose.msra.mxu0 0.0
    %691 = vmatprep.mubr.f32.mxu0 0.0
    %692 = vmatmul.mubr.f32.gmra.mrb[0].mxu0 %v623
    %v693 = vpop.f32.mrb[0].mxu0
    %v694 = vadd.f32 0.0, %v693
    %v695 = vpop.f32.mrb[0].mxu0
    %696 = vdwg.mxu0
    %v697 = vmul.f32 %v694, 0.17677669
    %v698 = vlaneseq
    %v699 = vshrl.u32 %v698, 7
    %v700 = vsub.s32 1, %v699
    %v701 = vrot.slane %v448, %v700
    %v702 = vadd.f32 %v697, %v701
    %v703 = vsel %vm532, %v702, -inf
    %704 = vmax.xlane.f32.xlu0 %v703
    %v705 = vpop.xlane.xlu0 %704
    %v706 = vsub.f32 %v702, %v705
    %v707 = vmul.f32 %v706, 1.442695
    %v708 = vpow.pop %v707
    %v709 = vsel %vm532, %v708, 0.0
    %710 = vadd.xlane.f32.xlu0 %v709
    %v711 = vpop.xlane.xlu0 %710
    %v712 = vrcp.pop %v711
    %v713 = vmul.f32 %v708, %v712
    %714 = vrot.lane.b32.xlu0 %v435, 64
    %v715 = vpop.permute.xlu0 %714
    %v718 = vsel %vm532, %v713, 0
    %720 = vmatprep.subr.mxu0 0.0
    %721 = vmatpush1.msra.mxu0 %v715
    %722 = vmatprep.subr.mxu0 0.0
    %723 = vmatpush1.msra.mxu0 0.0
    %724 = vmatprep.subr.mxu0 0.0
    %725 = vmatpush1.msra.mxu0 0.0
    %726 = vmatprep.subr.mxu0 0.0
    %727 = vmatpush1.msra.mxu0 0.0
    %728 = vmatprep.subr.mxu0 0.0
    %729 = vmatpush1.msra.mxu0 0.0
    %730 = vmatprep.subr.mxu0 0.0
    %731 = vmatpush1.msra.mxu0 0.0
    %732 = vmatprep.subr.mxu0 0.0
    %733 = vmatpush1.msra.mxu0 0.0
    %734 = vmatprep.subr.mxu0 0.0
    %735 = vmatpush1.msra.mxu0 0.0
    %736 = vmatprep.subr.mxu0 0.0
    %737 = vmatpush1.msra.mxu0 0.0
    %738 = vmatprep.subr.mxu0 0.0
    %739 = vmatpush1.msra.mxu0 0.0
    %740 = vmatprep.subr.mxu0 0.0
    %741 = vmatpush1.msra.mxu0 0.0
    %742 = vmatprep.subr.mxu0 0.0
    %743 = vmatpush1.msra.mxu0 0.0
    %744 = vmatprep.subr.mxu0 0.0
    %745 = vmatpush1.msra.mxu0 0.0
    %746 = vmatprep.subr.mxu0 0.0
    %747 = vmatpush1.msra.mxu0 0.0
    %748 = vmatprep.subr.mxu0 0.0
    %749 = vmatpush1.msra.mxu0 0.0
    %750 = vmatprep.subr.mxu0 0.0
    %751 = vmatpush1.msra.mxu0 0.0
    %752 = vmatprep.subr.mxu0 0.0
    %753 = vmatpush1.msra.mxu0 0.0
    %754 = vmatprep.subr.mxu0 0.0
    %755 = vmatpush1.msra.mxu0 0.0
    %756 = vmatprep.subr.mxu0 0.0
    %757 = vmatpush1.msra.mxu0 0.0
    %758 = vmatprep.subr.mxu0 0.0
    %759 = vmatpush1.msra.mxu0 0.0
    %760 = vmatprep.subr.mxu0 0.0
    %761 = vmatpush1.msra.mxu0 0.0
    %762 = vmatprep.subr.mxu0 0.0
    %763 = vmatpush1.msra.mxu0 0.0
    %764 = vmatprep.subr.mxu0 0.0
    %765 = vmatpush1.msra.mxu0 0.0
    %766 = vmatprep.subr.mxu0 0.0
    %767 = vmatpush1.msra.mxu0 0.0
    %768 = vmatprep.subr.mxu0 0.0
    %769 = vmatpush1.msra.mxu0 0.0
    %770 = vmatprep.subr.mxu0 0.0
    %771 = vmatpush1.msra.mxu0 0.0
    %772 = vmatprep.subr.mxu0 0.0
    %773 = vmatpush1.msra.mxu0 0.0
    %774 = vmatprep.subr.mxu0 0.0
    %775 = vmatpush1.msra.mxu0 0.0
    %776 = vmatprep.subr.mxu0 0.0
    %777 = vmatpush1.msra.mxu0 0.0
    %778 = vmatprep.subr.mxu0 0.0
    %779 = vmatpush1.msra.mxu0 0.0
    %780 = vmatprep.subr.mxu0 0.0
    %781 = vmatpush1.msra.mxu0 0.0
    %782 = vmatprep.subr.mxu0 0.0
    %783 = vmatpush1.msra.mxu0 0.0
    %784 = vmatprep.mubr.f32.mxu0 0.0
    %785 = vmatmul.mubr.f32.gmra.mrb[0].mxu0 %v718
    %v786 = vpop.f32.mrb[0].mxu0
    %v787 = vadd.f32 0.0, %v786
    %v788 = vpop.f32.mrb[0].mxu0
    %789 = vdwg.mxu0
    %791 = vrot.lane.b32.xlu0 %v440, 96
    %v792 = vpop.permute.xlu0 %791
    %v793 = vsel %vm266, %v440, 0
    %v795 = vsel %vm266, %v792, 0
    %797 = vmatprep.subr.mxu0 0.0
    %798 = vmatpush1.xpose.msra.mxu0 %v795
    %799 = vmatprep.subr.mxu0 0.0
    %800 = vmatpush1.xpose.msra.mxu0 0.0
    %801 = vmatprep.subr.mxu0 0.0
    %802 = vmatpush1.xpose.msra.mxu0 0.0
    %803 = vmatprep.subr.mxu0 0.0
    %804 = vmatpush1.xpose.msra.mxu0 0.0
    %805 = vmatprep.subr.mxu0 0.0
    %806 = vmatpush1.xpose.msra.mxu0 0.0
    %807 = vmatprep.subr.mxu0 0.0
    %808 = vmatpush1.xpose.msra.mxu0 0.0
    %809 = vmatprep.subr.mxu0 0.0
    %810 = vmatpush1.xpose.msra.mxu0 0.0
    %811 = vmatprep.subr.mxu0 0.0
    %812 = vmatpush1.xpose.msra.mxu0 0.0
    %813 = vmatprep.subr.mxu0 0.0
    %814 = vmatpush1.xpose.msra.mxu0 0.0
    %815 = vmatprep.subr.mxu0 0.0
    %816 = vmatpush1.xpose.msra.mxu0 0.0
    %817 = vmatprep.subr.mxu0 0.0
    %818 = vmatpush1.xpose.msra.mxu0 0.0
    %819 = vmatprep.subr.mxu0 0.0
    %820 = vmatpush1.xpose.msra.mxu0 0.0
    %821 = vmatprep.subr.mxu0 0.0
    %822 = vmatpush1.xpose.msra.mxu0 0.0
    %823 = vmatprep.subr.mxu0 0.0
    %824 = vmatpush1.xpose.msra.mxu0 0.0
    %825 = vmatprep.subr.mxu0 0.0
    %826 = vmatpush1.xpose.msra.mxu0 0.0
    %827 = vmatprep.subr.mxu0 0.0
    %828 = vmatpush1.xpose.msra.mxu0 0.0
    %829 = vmatprep.subr.mxu0 0.0
    %830 = vmatpush1.xpose.msra.mxu0 0.0
    %831 = vmatprep.subr.mxu0 0.0
    %832 = vmatpush1.xpose.msra.mxu0 0.0
    %833 = vmatprep.subr.mxu0 0.0
    %834 = vmatpush1.xpose.msra.mxu0 0.0
    %835 = vmatprep.subr.mxu0 0.0
    %836 = vmatpush1.xpose.msra.mxu0 0.0
    %837 = vmatprep.subr.mxu0 0.0
    %838 = vmatpush1.xpose.msra.mxu0 0.0
    %839 = vmatprep.subr.mxu0 0.0
    %840 = vmatpush1.xpose.msra.mxu0 0.0
    %841 = vmatprep.subr.mxu0 0.0
    %842 = vmatpush1.xpose.msra.mxu0 0.0
    %843 = vmatprep.subr.mxu0 0.0
    %844 = vmatpush1.xpose.msra.mxu0 0.0
    %845 = vmatprep.subr.mxu0 0.0
    %846 = vmatpush1.xpose.msra.mxu0 0.0
    %847 = vmatprep.subr.mxu0 0.0
    %848 = vmatpush1.xpose.msra.mxu0 0.0
    %849 = vmatprep.subr.mxu0 0.0
    %850 = vmatpush1.xpose.msra.mxu0 0.0
    %851 = vmatprep.subr.mxu0 0.0
    %852 = vmatpush1.xpose.msra.mxu0 0.0
    %853 = vmatprep.subr.mxu0 0.0
    %854 = vmatpush1.xpose.msra.mxu0 0.0
    %855 = vmatprep.subr.mxu0 0.0
    %856 = vmatpush1.xpose.msra.mxu0 0.0
    %857 = vmatprep.subr.mxu0 0.0
    %858 = vmatpush1.xpose.msra.mxu0 0.0
    %859 = vmatprep.subr.mxu0 0.0
    %860 = vmatpush1.xpose.msra.mxu0 0.0
    %861 = vmatprep.mubr.f32.mxu0 0.0
    %862 = vmatmul.mubr.f32.gmra.mrb[0].mxu0 %v793
    %v863 = vpop.f32.mrb[0].mxu0
    %v864 = vadd.f32 0.0, %v863
    %v865 = vpop.f32.mrb[0].mxu0
    %866 = vdwg.mxu0
    %v867 = vmul.f32 %v864, 0.17677669
    %v868 = vlaneseq
    %v869 = vshrl.u32 %v868, 7
    %v870 = vsub.s32 2, %v869
    %v871 = vrot.slane %v448, %v870
    %v872 = vadd.f32 %v867, %v871
    %v873 = vsel %vm532, %v872, -inf
    %874 = vmax.xlane.f32.xlu0 %v873
    %v875 = vpop.xlane.xlu0 %874
    %v876 = vsub.f32 %v872, %v875
    %v877 = vmul.f32 %v876, 1.442695
    %v878 = vpow.pop %v877
    %v879 = vsel %vm532, %v878, 0.0
    %880 = vadd.xlane.f32.xlu0 %v879
    %v881 = vpop.xlane.xlu0 %880
    %v882 = vrcp.pop %v881
    %v883 = vmul.f32 %v878, %v882
    %884 = vrot.lane.b32.xlu0 %v440, 64
    %v885 = vpop.permute.xlu0 %884
    %v888 = vsel %vm532, %v883, 0
    %890 = vmatprep.subr.mxu0 0.0
    %891 = vmatpush1.msra.mxu0 %v885
    %892 = vmatprep.subr.mxu0 0.0
    %893 = vmatpush1.msra.mxu0 0.0
    %894 = vmatprep.subr.mxu0 0.0
    %895 = vmatpush1.msra.mxu0 0.0
    %896 = vmatprep.subr.mxu0 0.0
    %897 = vmatpush1.msra.mxu0 0.0
    %898 = vmatprep.subr.mxu0 0.0
    %899 = vmatpush1.msra.mxu0 0.0
    %900 = vmatprep.subr.mxu0 0.0
    %901 = vmatpush1.msra.mxu0 0.0
    %902 = vmatprep.subr.mxu0 0.0
    %903 = vmatpush1.msra.mxu0 0.0
    %904 = vmatprep.subr.mxu0 0.0
    %905 = vmatpush1.msra.mxu0 0.0
    %906 = vmatprep.subr.mxu0 0.0
    %907 = vmatpush1.msra.mxu0 0.0
    %908 = vmatprep.subr.mxu0 0.0
    %909 = vmatpush1.msra.mxu0 0.0
    %910 = vmatprep.subr.mxu0 0.0
    %911 = vmatpush1.msra.mxu0 0.0
    %912 = vmatprep.subr.mxu0 0.0
    %913 = vmatpush1.msra.mxu0 0.0
    %914 = vmatprep.subr.mxu0 0.0
    %915 = vmatpush1.msra.mxu0 0.0
    %916 = vmatprep.subr.mxu0 0.0
    %917 = vmatpush1.msra.mxu0 0.0
    %918 = vmatprep.subr.mxu0 0.0
    %919 = vmatpush1.msra.mxu0 0.0
    %920 = vmatprep.subr.mxu0 0.0
    %921 = vmatpush1.msra.mxu0 0.0
    %922 = vmatprep.subr.mxu0 0.0
    %923 = vmatpush1.msra.mxu0 0.0
    %924 = vmatprep.subr.mxu0 0.0
    %925 = vmatpush1.msra.mxu0 0.0
    %926 = vmatprep.subr.mxu0 0.0
    %927 = vmatpush1.msra.mxu0 0.0
    %928 = vmatprep.subr.mxu0 0.0
    %929 = vmatpush1.msra.mxu0 0.0
    %930 = vmatprep.subr.mxu0 0.0
    %931 = vmatpush1.msra.mxu0 0.0
    %932 = vmatprep.subr.mxu0 0.0
    %933 = vmatpush1.msra.mxu0 0.0
    %934 = vmatprep.subr.mxu0 0.0
    %935 = vmatpush1.msra.mxu0 0.0
    %936 = vmatprep.subr.mxu0 0.0
    %937 = vmatpush1.msra.mxu0 0.0
    %938 = vmatprep.subr.mxu0 0.0
    %939 = vmatpush1.msra.mxu0 0.0
    %940 = vmatprep.subr.mxu0 0.0
    %941 = vmatpush1.msra.mxu0 0.0
    %942 = vmatprep.subr.mxu0 0.0
    %943 = vmatpush1.msra.mxu0 0.0
    %944 = vmatprep.subr.mxu0 0.0
    %945 = vmatpush1.msra.mxu0 0.0
    %946 = vmatprep.subr.mxu0 0.0
    %947 = vmatpush1.msra.mxu0 0.0
    %948 = vmatprep.subr.mxu0 0.0
    %949 = vmatpush1.msra.mxu0 0.0
    %950 = vmatprep.subr.mxu0 0.0
    %951 = vmatpush1.msra.mxu0 0.0
    %952 = vmatprep.subr.mxu0 0.0
    %953 = vmatpush1.msra.mxu0 0.0
    %954 = vmatprep.mubr.f32.mxu0 0.0
    %955 = vmatmul.mubr.f32.gmra.mrb[0].mxu0 %v888
    %v956 = vpop.f32.mrb[0].mxu0
    %v957 = vadd.f32 0.0, %v956
    %v958 = vpop.f32.mrb[0].mxu0
    %959 = vdwg.mxu0
    %961 = vrot.lane.b32.xlu0 %v445, 96
    %v962 = vpop.permute.xlu0 %961
    %v963 = vsel %vm266, %v445, 0
    %v965 = vsel %vm266, %v962, 0
    %967 = vmatprep.subr.mxu0 0.0
    %968 = vmatpush1.xpose.msra.mxu0 %v965
    %969 = vmatprep.subr.mxu0 0.0
    %970 = vmatpush1.xpose.msra.mxu0 0.0
    %971 = vmatprep.subr.mxu0 0.0
    %972 = vmatpush1.xpose.msra.mxu0 0.0
    %973 = vmatprep.subr.mxu0 0.0
    %974 = vmatpush1.xpose.msra.mxu0 0.0
    %975 = vmatprep.subr.mxu0 0.0
    %976 = vmatpush1.xpose.msra.mxu0 0.0
    %977 = vmatprep.subr.mxu0 0.0
    %978 = vmatpush1.xpose.msra.mxu0 0.0
    %979 = vmatprep.subr.mxu0 0.0
    %980 = vmatpush1.xpose.msra.mxu0 0.0
    %981 = vmatprep.subr.mxu0 0.0
    %982 = vmatpush1.xpose.msra.mxu0 0.0
    %983 = vmatprep.subr.mxu0 0.0
    %984 = vmatpush1.xpose.msra.mxu0 0.0
    %985 = vmatprep.subr.mxu0 0.0
    %986 = vmatpush1.xpose.msra.mxu0 0.0
    %987 = vmatprep.subr.mxu0 0.0
    %988 = vmatpush1.xpose.msra.mxu0 0.0
    %989 = vmatprep.subr.mxu0 0.0
    %990 = vmatpush1.xpose.msra.mxu0 0.0
    %991 = vmatprep.subr.mxu0 0.0
    %992 = vmatpush1.xpose.msra.mxu0 0.0
    %993 = vmatprep.subr.mxu0 0.0
    %994 = vmatpush1.xpose.msra.mxu0 0.0
    %995 = vmatprep.subr.mxu0 0.0
    %996 = vmatpush1.xpose.msra.mxu0 0.0
    %997 = vmatprep.subr.mxu0 0.0
    %998 = vmatpush1.xpose.msra.mxu0 0.0
    %999 = vmatprep.subr.mxu0 0.0
    %1000 = vmatpush1.xpose.msra.mxu0 0.0
    %1001 = vmatprep.subr.mxu0 0.0
    %1002 = vmatpush1.xpose.msra.mxu0 0.0
    %1003 = vmatprep.subr.mxu0 0.0
    %1004 = vmatpush1.xpose.msra.mxu0 0.0
    %1005 = vmatprep.subr.mxu0 0.0
    %1006 = vmatpush1.xpose.msra.mxu0 0.0
    %1007 = vmatprep.subr.mxu0 0.0
    %1008 = vmatpush1.xpose.msra.mxu0 0.0
    %1009 = vmatprep.subr.mxu0 0.0
    %1010 = vmatpush1.xpose.msra.mxu0 0.0
    %1011 = vmatprep.subr.mxu0 0.0
    %1012 = vmatpush1.xpose.msra.mxu0 0.0
    %1013 = vmatprep.subr.mxu0 0.0
    %1014 = vmatpush1.xpose.msra.mxu0 0.0
    %1015 = vmatprep.subr.mxu0 0.0
    %1016 = vmatpush1.xpose.msra.mxu0 0.0
    %1017 = vmatprep.subr.mxu0 0.0
    %1018 = vmatpush1.xpose.msra.mxu0 0.0
    %1019 = vmatprep.subr.mxu0 0.0
    %1020 = vmatpush1.xpose.msra.mxu0 0.0
    %1021 = vmatprep.subr.mxu0 0.0
    %1022 = vmatpush1.xpose.msra.mxu0 0.0
    %1023 = vmatprep.subr.mxu0 0.0
    %1024 = vmatpush1.xpose.msra.mxu0 0.0
    %1025 = vmatprep.subr.mxu0 0.0
    %1026 = vmatpush1.xpose.msra.mxu0 0.0
    %1027 = vmatprep.subr.mxu0 0.0
    %1028 = vmatpush1.xpose.msra.mxu0 0.0
    %1029 = vmatprep.subr.mxu0 0.0
    %1030 = vmatpush1.xpose.msra.mxu0 0.0
    %1031 = vmatprep.mubr.f32.mxu0 0.0
    %1032 = vmatmul.mubr.f32.gmra.mrb[0].mxu0 %v963
    %v1033 = vpop.f32.mrb[0].mxu0
    %v1034 = vadd.f32 0.0, %v1033
    %v1035 = vpop.f32.mrb[0].mxu0
    %1036 = vdwg.mxu0
    %v1037 = vmul.f32 %v1034, 0.17677669
    %v1038 = vlaneseq
    %v1039 = vshrl.u32 %v1038, 7
    %v1040 = vsub.s32 3, %v1039
    %v1041 = vrot.slane %v448, %v1040
    %v1042 = vadd.f32 %v1037, %v1041
    %v1043 = vsel %vm532, %v1042, -inf
    %1044 = vmax.xlane.f32.xlu0 %v1043
    %v1045 = vpop.xlane.xlu0 %1044
    %v1046 = vsub.f32 %v1042, %v1045
    %v1047 = vmul.f32 %v1046, 1.442695
    %v1048 = vpow.pop %v1047
    %v1049 = vsel %vm532, %v1048, 0.0
    %1050 = vadd.xlane.f32.xlu0 %v1049
    %v1051 = vpop.xlane.xlu0 %1050
    %v1052 = vrcp.pop %v1051
    %v1053 = vmul.f32 %v1048, %v1052
    %1054 = vrot.lane.b32.xlu0 %v445, 64
    %v1055 = vpop.permute.xlu0 %1054
    %v1058 = vsel %vm532, %v1053, 0
    %1060 = vmatprep.subr.mxu0 0.0
    %1061 = vmatpush1.msra.mxu0 %v1055
    %1062 = vmatprep.subr.mxu0 0.0
    %1063 = vmatpush1.msra.mxu0 0.0
    %1064 = vmatprep.subr.mxu0 0.0
    %1065 = vmatpush1.msra.mxu0 0.0
    %1066 = vmatprep.subr.mxu0 0.0
    %1067 = vmatpush1.msra.mxu0 0.0
    %1068 = vmatprep.subr.mxu0 0.0
    %1069 = vmatpush1.msra.mxu0 0.0
    %1070 = vmatprep.subr.mxu0 0.0
    %1071 = vmatpush1.msra.mxu0 0.0
    %1072 = vmatprep.subr.mxu0 0.0
    %1073 = vmatpush1.msra.mxu0 0.0
    %1074 = vmatprep.subr.mxu0 0.0
    %1075 = vmatpush1.msra.mxu0 0.0
    %1076 = vmatprep.subr.mxu0 0.0
    %1077 = vmatpush1.msra.mxu0 0.0
    %1078 = vmatprep.subr.mxu0 0.0
    %1079 = vmatpush1.msra.mxu0 0.0
    %1080 = vmatprep.subr.mxu0 0.0
    %1081 = vmatpush1.msra.mxu0 0.0
    %1082 = vmatprep.subr.mxu0 0.0
    %1083 = vmatpush1.msra.mxu0 0.0
    %1084 = vmatprep.subr.mxu0 0.0
    %1085 = vmatpush1.msra.mxu0 0.0
    %1086 = vmatprep.subr.mxu0 0.0
    %1087 = vmatpush1.msra.mxu0 0.0
    %1088 = vmatprep.subr.mxu0 0.0
    %1089 = vmatpush1.msra.mxu0 0.0
    %1090 = vmatprep.subr.mxu0 0.0
    %1091 = vmatpush1.msra.mxu0 0.0
    %1092 = vmatprep.subr.mxu0 0.0
    %1093 = vmatpush1.msra.mxu0 0.0
    %1094 = vmatprep.subr.mxu0 0.0
    %1095 = vmatpush1.msra.mxu0 0.0
    %1096 = vmatprep.subr.mxu0 0.0
    %1097 = vmatpush1.msra.mxu0 0.0
    %1098 = vmatprep.subr.mxu0 0.0
    %1099 = vmatpush1.msra.mxu0 0.0
    %1100 = vmatprep.subr.mxu0 0.0
    %1101 = vmatpush1.msra.mxu0 0.0
    %1102 = vmatprep.subr.mxu0 0.0
    %1103 = vmatpush1.msra.mxu0 0.0
    %1104 = vmatprep.subr.mxu0 0.0
    %1105 = vmatpush1.msra.mxu0 0.0
    %1106 = vmatprep.subr.mxu0 0.0
    %1107 = vmatpush1.msra.mxu0 0.0
    %1108 = vmatprep.subr.mxu0 0.0
    %1109 = vmatpush1.msra.mxu0 0.0
    %1110 = vmatprep.subr.mxu0 0.0
    %1111 = vmatpush1.msra.mxu0 0.0
    %1112 = vmatprep.subr.mxu0 0.0
    %1113 = vmatpush1.msra.mxu0 0.0
    %1114 = vmatprep.subr.mxu0 0.0
    %1115 = vmatpush1.msra.mxu0 0.0
    %1116 = vmatprep.subr.mxu0 0.0
    %1117 = vmatpush1.msra.mxu0 0.0
    %1118 = vmatprep.subr.mxu0 0.0
    %1119 = vmatpush1.msra.mxu0 0.0
    %1120 = vmatprep.subr.mxu0 0.0
    %1121 = vmatpush1.msra.mxu0 0.0
    %1122 = vmatprep.subr.mxu0 0.0
    %1123 = vmatpush1.msra.mxu0 0.0
    %1124 = vmatprep.mubr.f32.mxu0 0.0
    %1125 = vmatmul.mubr.f32.gmra.mrb[0].mxu0 %v1058
    %v1126 = vpop.f32.mrb[0].mxu0
    %v1127 = vadd.f32 0.0, %v1126
    %v1128 = vpop.f32.mrb[0].mxu0
    %1129 = vdwg.mxu0
    %v1130 = vld [vmem:[%s12] sm:$0xff]
    %v1131 = vld [vmem:[%s12 + $0x8] sm:$0xff]
    %v1132 = vld [vmem:[%s12 + $0x10] sm:$0xff]
    %v1133 = vld [vmem:[%s12 + $0x18] sm:$0xff]
    %v1134 = vld [vmem:[%s13] sm:$0x1]
    %v1136 = vlaneseq
    %v1137 = vshrl.u32 %v1136, 7
    %v1138 = vsub.s32 0, %v1137
    %v1139 = vrot.slane %v1134, %v1138
    %v1142 = vsel %vm266, %v617, 0
    %v1145 = vsel %vm266, %v787, 0
    %v1148 = vsel %vm266, %v957, 0
    %v1151 = vsel %vm266, %v1127, 0
    %1153 = vmatprep.subr.mxu0 0.0
    %1154 = vmatpush1.msra.mxu0 %v1130
    %1155 = vmatprep.subr.mxu0 0.0
    %1156 = vmatpush1.msra.mxu0 %v1131
    %1157 = vmatprep.subr.mxu0 0.0
    %1158 = vmatpush1.msra.mxu0 %v1132
    %1159 = vmatprep.subr.mxu0 0.0
    %1160 = vmatpush1.msra.mxu0 %v1133
    %1161 = vmatprep.subr.mxu0 0.0
    %1162 = vmatpush1.msra.mxu0 0.0
    %1163 = vmatprep.subr.mxu0 0.0
    %1164 = vmatpush1.msra.mxu0 0.0
    %1165 = vmatprep.subr.mxu0 0.0
    %1166 = vmatpush1.msra.mxu0 0.0
    %1167 = vmatprep.subr.mxu0 0.0
    %1168 = vmatpush1.msra.mxu0 0.0
    %1169 = vmatprep.subr.mxu0 0.0
    %1170 = vmatpush1.msra.mxu0 0.0
    %1171 = vmatprep.subr.mxu0 0.0
    %1172 = vmatpush1.msra.mxu0 0.0
    %1173 = vmatprep.subr.mxu0 0.0
    %1174 = vmatpush1.msra.mxu0 0.0
    %1175 = vmatprep.subr.mxu0 0.0
    %1176 = vmatpush1.msra.mxu0 0.0
    %1177 = vmatprep.subr.mxu0 0.0
    %1178 = vmatpush1.msra.mxu0 0.0
    %1179 = vmatprep.subr.mxu0 0.0
    %1180 = vmatpush1.msra.mxu0 0.0
    %1181 = vmatprep.subr.mxu0 0.0
    %1182 = vmatpush1.msra.mxu0 0.0
    %1183 = vmatprep.subr.mxu0 0.0
    %1184 = vmatpush1.msra.mxu0 0.0
    %1185 = vmatprep.subr.mxu0 0.0
    %1186 = vmatpush1.msra.mxu0 0.0
    %1187 = vmatprep.subr.mxu0 0.0
    %1188 = vmatpush1.msra.mxu0 0.0
    %1189 = vmatprep.subr.mxu0 0.0
    %1190 = vmatpush1.msra.mxu0 0.0
    %1191 = vmatprep.subr.mxu0 0.0
    %1192 = vmatpush1.msra.mxu0 0.0
    %1193 = vmatprep.subr.mxu0 0.0
    %1194 = vmatpush1.msra.mxu0 0.0
    %1195 = vmatprep.subr.mxu0 0.0
    %1196 = vmatpush1.msra.mxu0 0.0
    %1197 = vmatprep.subr.mxu0 0.0
    %1198 = vmatpush1.msra.mxu0 0.0
    %1199 = vmatprep.subr.mxu0 0.0
    %1200 = vmatpush1.msra.mxu0 0.0
    %1201 = vmatprep.subr.mxu0 0.0
    %1202 = vmatpush1.msra.mxu0 0.0
    %1203 = vmatprep.subr.mxu0 0.0
    %1204 = vmatpush1.msra.mxu0 0.0
    %1205 = vmatprep.subr.mxu0 0.0
    %1206 = vmatpush1.msra.mxu0 0.0
    %1207 = vmatprep.subr.mxu0 0.0
    %1208 = vmatpush1.msra.mxu0 0.0
    %1209 = vmatprep.subr.mxu0 0.0
    %1210 = vmatpush1.msra.mxu0 0.0
    %1211 = vmatprep.subr.mxu0 0.0
    %1212 = vmatpush1.msra.mxu0 0.0
    %1213 = vmatprep.subr.mxu0 0.0
    %1214 = vmatpush1.msra.mxu0 0.0
    %1215 = vmatprep.subr.mxu0 0.0
    %1216 = vmatpush1.msra.mxu0 0.0
    %1217 = vmatprep.mubr.f32.mxu0 0.0
    %1218 = vmatmul.mubr.f32.gmra.mrb[0].mxu0 %v1142
    %v1219 = vpop.f32.mrb[0].mxu0
    %v1220 = vadd.f32 %v1139, %v1219
    %v1221 = vpop.f32.mrb[0].mxu0
    %1222 = vmatprep.mubr.f32.mxu0 0.0
    %1223 = vmatmul.mubr.f32.gmra.mrb[0].mxu0 %v1145
    %v1224 = vpop.f32.mrb[0].mxu0
    %v1225 = vadd.f32 %v1139, %v1224
    %v1226 = vpop.f32.mrb[0].mxu0
    %1227 = vmatprep.mubr.f32.mxu0 0.0
    %1228 = vmatmul.mubr.f32.gmra.mrb[0].mxu0 %v1148
    %v1229 = vpop.f32.mrb[0].mxu0
    %v1230 = vadd.f32 %v1139, %v1229
    %v1231 = vpop.f32.mrb[0].mxu0
    %1232 = vmatprep.mubr.f32.mxu0 0.0
    %1233 = vmatmul.mubr.f32.gmra.mrb[0].mxu0 %v1151
    %v1234 = vpop.f32.mrb[0].mxu0
    %v1235 = vadd.f32 %v1139, %v1234
    %v1236 = vpop.f32.mrb[0].mxu0
    %1237 = vdwg.mxu0
    %v1238 = vadd.f32 %v336, %v1220
    %v1239 = vadd.f32 %v337, %v1225
    %v1240 = vadd.f32 %v338, %v1230
    %v1241 = vadd.f32 %v339, %v1235
    %v1242 = vld [vmem:[%s14] sm:$0x1]
    %v1243 = vld [vmem:[%s15] sm:$0x1]
    %v1244 = vsel %vm266, %v1238, 0.0
    %1245 = vadd.xlane.f32.xlu0 %v1244
    %v1246 = vpop.xlane.xlu0 %1245
    %v1247 = vsel %vm266, %v1239, 0.0
    %1248 = vadd.xlane.f32.xlu0 %v1247
    %v1249 = vpop.xlane.xlu0 %1248
    %v1250 = vsel %vm266, %v1240, 0.0
    %1251 = vadd.xlane.f32.xlu0 %v1250
    %v1252 = vpop.xlane.xlu0 %1251
    %v1253 = vsel %vm266, %v1241, 0.0
    %1254 = vadd.xlane.f32.xlu0 %v1253
    %v1255 = vpop.xlane.xlu0 %1254
    %v1256 = vmul.f32 %v1246, %v279
    %v1257 = vmul.f32 %v1249, %v279
    %v1258 = vmul.f32 %v1252, %v279
    %v1259 = vmul.f32 %v1255, %v279
    %v1260 = vsub.f32 %v1238, %v1256
    %v1261 = vsub.f32 %v1239, %v1257
    %v1262 = vsub.f32 %v1240, %v1258
    %v1263 = vsub.f32 %v1241, %v1259
    %v1264 = vmul.f32 %v1260, %v1260
    %v1265 = vmul.f32 %v1261, %v1261
    %v1266 = vmul.f32 %v1262, %v1262
    %v1267 = vmul.f32 %v1263, %v1263
    %v1268 = vsel %vm266, %v1264, 0.0
    %1269 = vadd.xlane.f32.xlu0 %v1268
    %v1270 = vpop.xlane.xlu0 %1269
    %v1271 = vsel %vm266, %v1265, 0.0
    %1272 = vadd.xlane.f32.xlu0 %v1271
    %v1273 = vpop.xlane.xlu0 %1272
    %v1274 = vsel %vm266, %v1266, 0.0
    %1275 = vadd.xlane.f32.xlu0 %v1274
    %v1276 = vpop.xlane.xlu0 %1275
    %v1277 = vsel %vm266, %v1267, 0.0
    %1278 = vadd.xlane.f32.xlu0 %v1277
    %v1279 = vpop.xlane.xlu0 %1278
    %v1280 = vmul.f32 %v1270, %v279
    %v1281 = vmul.f32 %v1273, %v279
    %v1282 = vmul.f32 %v1276, %v279
    %v1283 = vmul.f32 %v1279, %v279
    %v1284 = vadd.f32 %v1280, 1e-12
    %v1285 = vadd.f32 %v1281, 1e-12
    %v1286 = vadd.f32 %v1282, 1e-12
    %v1287 = vadd.f32 %v1283, 1e-12
    %v1288 = vrsqrt.pop %v1284
    %v1289 = vrsqrt.pop %v1285
    %v1290 = vrsqrt.pop %v1286
    %v1291 = vrsqrt.pop %v1287
    %v1292 = vmul.f32 %v1260, %v1288
    %v1293 = vmul.f32 %v1261, %v1289
    %v1294 = vmul.f32 %v1262, %v1290
    %v1295 = vmul.f32 %v1263, %v1291
    %v1297 = vlaneseq
    %v1298 = vshrl.u32 %v1297, 7
    %v1299 = vsub.s32 0, %v1298
    %v1300 = vrot.slane %v1242, %v1299
    %v1302 = vmul.f32 %v1292, %v1300
    %v1303 = vmul.f32 %v1293, %v1300
    %v1304 = vmul.f32 %v1294, %v1300
    %v1305 = vmul.f32 %v1295, %v1300
    %v1307 = vlaneseq
    %v1308 = vshrl.u32 %v1307, 7
    %v1309 = vsub.s32 0, %v1308
    %v1310 = vrot.slane %v1243, %v1309
    %v1312 = vadd.f32 %v1302, %v1310
    %v1313 = vadd.f32 %v1303, %v1310
    %v1314 = vadd.f32 %v1304, %v1310
    %v1315 = vadd.f32 %v1305, %v1310
    %v1316 = vld [vmem:[%s16] sm:$0xff]
    %v1317 = vld [vmem:[%s16 + $0x8] sm:$0xff]
    %v1318 = vld [vmem:[%s16 + $0x10] sm:$0xff]
    %v1319 = vld [vmem:[%s16 + $0x18] sm:$0xff]
    %v1320 = vld [vmem:[%s17] sm:$0x1]
    %v1322 = vlaneseq
    %v1323 = vshrl.u32 %v1322, 7
    %v1324 = vsub.s32 0, %v1323
    %v1325 = vrot.slane %v1320, %v1324
    %v1328 = vsel %vm266, %v1312, 0
    %v1331 = vsel %vm266, %v1313, 0
    %v1334 = vsel %vm266, %v1314, 0
    %v1337 = vsel %vm266, %v1315, 0
    %1339 = vmatprep.subr.mxu0 0.0
    %1340 = vmatpush1.msra.mxu0 %v1316
    %1341 = vmatprep.subr.mxu0 0.0
    %1342 = vmatpush1.msra.mxu0 %v1317
    %1343 = vmatprep.subr.mxu0 0.0
    %1344 = vmatpush1.msra.mxu0 %v1318
    %1345 = vmatprep.subr.mxu0 0.0
    %1346 = vmatpush1.msra.mxu0 %v1319
    %1347 = vmatprep.subr.mxu0 0.0
    %1348 = vmatpush1.msra.mxu0 0.0
    %1349 = vmatprep.subr.mxu0 0.0
    %1350 = vmatpush1.msra.mxu0 0.0
    %1351 = vmatprep.subr.mxu0 0.0
    %1352 = vmatpush1.msra.mxu0 0.0
    %1353 = vmatprep.subr.mxu0 0.0
    %1354 = vmatpush1.msra.mxu0 0.0
    %1355 = vmatprep.subr.mxu0 0.0
    %1356 = vmatpush1.msra.mxu0 0.0
    %1357 = vmatprep.subr.mxu0 0.0
    %1358 = vmatpush1.msra.mxu0 0.0
    %1359 = vmatprep.subr.mxu0 0.0
    %1360 = vmatpush1.msra.mxu0 0.0
    %1361 = vmatprep.subr.mxu0 0.0
    %1362 = vmatpush1.msra.mxu0 0.0
    %1363 = vmatprep.subr.mxu0 0.0
    %1364 = vmatpush1.msra.mxu0 0.0
    %1365 = vmatprep.subr.mxu0 0.0
    %1366 = vmatpush1.msra.mxu0 0.0
    %1367 = vmatprep.subr.mxu0 0.0
    %1368 = vmatpush1.msra.mxu0 0.0
    %1369 = vmatprep.subr.mxu0 0.0
    %1370 = vmatpush1.msra.mxu0 0.0
    %1371 = vmatprep.subr.mxu0 0.0
    %1372 = vmatpush1.msra.mxu0 0.0
    %1373 = vmatprep.subr.mxu0 0.0
    %1374 = vmatpush1.msra.mxu0 0.0
    %1375 = vmatprep.subr.mxu0 0.0
    %1376 = vmatpush1.msra.mxu0 0.0
    %1377 = vmatprep.subr.mxu0 0.0
    %1378 = vmatpush1.msra.mxu0 0.0
    %1379 = vmatprep.subr.mxu0 0.0
    %1380 = vmatpush1.msra.mxu0 0.0
    %1381 = vmatprep.subr.mxu0 0.0
    %1382 = vmatpush1.msra.mxu0 0.0
    %1383 = vmatprep.subr.mxu0 0.0
    %1384 = vmatpush1.msra.mxu0 0.0
    %1385 = vmatprep.subr.mxu0 0.0
    %1386 = vmatpush1.msra.mxu0 0.0
    %1387 = vmatprep.subr.mxu0 0.0
    %1388 = vmatpush1.msra.mxu0 0.0
    %1389 = vmatprep.subr.mxu0 0.0
    %1390 = vmatpush1.msra.mxu0 0.0
    %1391 = vmatprep.subr.mxu0 0.0
    %1392 = vmatpush1.msra.mxu0 0.0
    %1393 = vmatprep.subr.mxu0 0.0
    %1394 = vmatpush1.msra.mxu0 0.0
    %1395 = vmatprep.subr.mxu0 0.0
    %1396 = vmatpush1.msra.mxu0 0.0
    %1397 = vmatprep.subr.mxu0 0.0
    %1398 = vmatpush1.msra.mxu0 0.0
    %1399 = vmatprep.subr.mxu0 0.0
    %1400 = vmatpush1.msra.mxu0 0.0
    %1401 = vmatprep.subr.mxu0 0.0
    %1402 = vmatpush1.msra.mxu0 0.0
    %1403 = vmatprep.mubr.f32.mxu0 0.0
    %1404 = vmatmul.mubr.f32.gmra.mrb[0].mxu0 %v1328
    %v1405 = vpop.f32.mrb[0].mxu0
    %v1406 = vadd.f32 %v1325, %v1405
    %v1407 = vpop.f32.mrb[0].mxu0
    %1408 = vmatprep.mubr.f32.mxu0 0.0
    %1409 = vmatmul.mubr.f32.gmra.mrb[0].mxu0 %v1331
    %v1410 = vpop.f32.mrb[0].mxu0
    %v1411 = vadd.f32 %v1325, %v1410
    %v1412 = vpop.f32.mrb[0].mxu0
    %1413 = vmatprep.mubr.f32.mxu0 0.0
    %1414 = vmatmul.mubr.f32.gmra.mrb[0].mxu0 %v1334
    %v1415 = vpop.f32.mrb[0].mxu0
    %v1416 = vadd.f32 %v1325, %v1415
    %v1417 = vpop.f32.mrb[0].mxu0
    %1418 = vmatprep.mubr.f32.mxu0 0.0
    %1419 = vmatmul.mubr.f32.gmra.mrb[0].mxu0 %v1337
    %v1420 = vpop.f32.mrb[0].mxu0
    %v1421 = vadd.f32 %v1325, %v1420
    %v1422 = vpop.f32.mrb[0].mxu0
    %1423 = vdwg.mxu0
    %v1424 = vmul.f32 %v1406, %v1406
    %v1425 = vmul.f32 %v1411, %v1411
    %v1426 = vmul.f32 %v1416, %v1416
    %v1427 = vmul.f32 %v1421, %v1421
    %v1428 = vmul.f32 %v1406, %v1424
    %v1429 = vmul.f32 %v1411, %v1425
    %v1430 = vmul.f32 %v1416, %v1426
    %v1431 = vmul.f32 %v1421, %v1427
    %v1432 = vmul.f32 %v1428, 0.044715
    %v1433 = vmul.f32 %v1429, 0.044715
    %v1434 = vmul.f32 %v1430, 0.044715
    %v1435 = vmul.f32 %v1431, 0.044715
    %v1436 = vadd.f32 %v1406, %v1432
    %v1437 = vadd.f32 %v1411, %v1433
    %v1438 = vadd.f32 %v1416, %v1434
    %v1439 = vadd.f32 %v1421, %v1435
    %v1440 = vmul.f32 %v1436, 0.7978846
    %v1441 = vmul.f32 %v1437, 0.7978846
    %v1442 = vmul.f32 %v1438, 0.7978846
    %v1443 = vmul.f32 %v1439, 0.7978846
    %v1444 = vtanh.pop %v1440
    %v1445 = vtanh.pop %v1441
    %v1446 = vtanh.pop %v1442
    %v1447 = vtanh.pop %v1443
    %v1448 = vadd.f32 %v1444, 1.0
    %v1449 = vadd.f32 %v1445, 1.0
    %v1450 = vadd.f32 %v1446, 1.0
    %v1451 = vadd.f32 %v1447, 1.0
    %v1452 = vmul.f32 %v1448, 0.5
    %v1453 = vmul.f32 %v1449, 0.5
    %v1454 = vmul.f32 %v1450, 0.5
    %v1455 = vmul.f32 %v1451, 0.5
    %v1456 = vmul.f32 %v1406, %v1452
    %v1457 = vmul.f32 %v1411, %v1453
    %v1458 = vmul.f32 %v1416, %v1454
    %v1459 = vmul.f32 %v1421, %v1455
    %v1460 = vld [vmem:[%s18] sm:$0xff]
    %v1461 = vld [vmem:[%s18 + $0x8] sm:$0xff]
    %v1462 = vld [vmem:[%s18 + $0x10] sm:$0xff]
    %v1463 = vld [vmem:[%s18 + $0x18] sm:$0xff]
    %v1464 = vld [vmem:[%s18 + $0x20] sm:$0xff]
    %v1465 = vld [vmem:[%s18 + $0x28] sm:$0xff]
    %v1466 = vld [vmem:[%s18 + $0x30] sm:$0xff]
    %v1467 = vld [vmem:[%s18 + $0x38] sm:$0xff]
    %v1468 = vld [vmem:[%s19] sm:$0x1]
    %v1470 = vlaneseq
    %v1471 = vshrl.u32 %v1470, 7
    %v1472 = vsub.s32 0, %v1471
    %v1473 = vrot.slane %v1468, %v1472
    %v1476 = vsel %vm121, %v1456, 0
    %v1479 = vsel %vm121, %v1457, 0
    %v1482 = vsel %vm121, %v1458, 0
    %v1485 = vsel %vm121, %v1459, 0
    %1487 = vmatprep.subr.mxu0 0.0
    %1488 = vmatpush1.msra.mxu0 %v1460
    %1489 = vmatprep.subr.mxu0 0.0
    %1490 = vmatpush1.msra.mxu0 %v1461
    %1491 = vmatprep.subr.mxu0 0.0
    %1492 = vmatpush1.msra.mxu0 %v1462
    %1493 = vmatprep.subr.mxu0 0.0
    %1494 = vmatpush1.msra.mxu0 %v1463
    %1495 = vmatprep.subr.mxu0 0.0
    %1496 = vmatpush1.msra.mxu0 %v1464
    %1497 = vmatprep.subr.mxu0 0.0
    %1498 = vmatpush1.msra.mxu0 %v1465
    %1499 = vmatprep.subr.mxu0 0.0
    %1500 = vmatpush1.msra.mxu0 %v1466
    %1501 = vmatprep.subr.mxu0 0.0
    %1502 = vmatpush1.msra.mxu0 %v1467
    %1503 = vmatprep.subr.mxu0 0.0
    %1504 = vmatpush1.msra.mxu0 0.0
    %1505 = vmatprep.subr.mxu0 0.0
    %1506 = vmatpush1.msra.mxu0 0.0
    %1507 = vmatprep.subr.mxu0 0.0
    %1508 = vmatpush1.msra.mxu0 0.0
    %1509 = vmatprep.subr.mxu0 0.0
    %1510 = vmatpush1.msra.mxu0 0.0
    %1511 = vmatprep.subr.mxu0 0.0
    %1512 = vmatpush1.msra.mxu0 0.0
    %1513 = vmatprep.subr.mxu0 0.0
    %1514 = vmatpush1.msra.mxu0 0.0
    %1515 = vmatprep.subr.mxu0 0.0
    %1516 = vmatpush1.msra.mxu0 0.0
    %1517 = vmatprep.subr.mxu0 0.0
    %1518 = vmatpush1.msra.mxu0 0.0
    %1519 = vmatprep.subr.mxu0 0.0
    %1520 = vmatpush1.msra.mxu0 0.0
    %1521 = vmatprep.subr.mxu0 0.0
    %1522 = vmatpush1.msra.mxu0 0.0
    %1523 = vmatprep.subr.mxu0 0.0
    %1524 = vmatpush1.msra.mxu0 0.0
    %1525 = vmatprep.subr.mxu0 0.0
    %1526 = vmatpush1.msra.mxu0 0.0
    %1527 = vmatprep.subr.mxu0 0.0
    %1528 = vmatpush1.msra.mxu0 0.0
    %1529 = vmatprep.subr.mxu0 0.0
    %1530 = vmatpush1.msra.mxu0 0.0
    %1531 = vmatprep.subr.mxu0 0.0
    %1532 = vmatpush1.msra.mxu0 0.0
    %1533 = vmatprep.subr.mxu0 0.0
    %1534 = vmatpush1.msra.mxu0 0.0
    %1535 = vmatprep.subr.mxu0 0.0
    %1536 = vmatpush1.msra.mxu0 0.0
    %1537 = vmatprep.subr.mxu0 0.0
    %1538 = vmatpush1.msra.mxu0 0.0
    %1539 = vmatprep.subr.mxu0 0.0
    %1540 = vmatpush1.msra.mxu0 0.0
    %1541 = vmatprep.subr.mxu0 0.0
    %1542 = vmatpush1.msra.mxu0 0.0
    %1543 = vmatprep.subr.mxu0 0.0
    %1544 = vmatpush1.msra.mxu0 0.0
    %1545 = vmatprep.subr.mxu0 0.0
    %1546 = vmatpush1.msra.mxu0 0.0
    %1547 = vmatprep.subr.mxu0 0.0
    %1548 = vmatpush1.msra.mxu0 0.0
    %1549 = vmatprep.subr.mxu0 0.0
    %1550 = vmatpush1.msra.mxu0 0.0
    %1551 = vmatprep.mubr.f32.mxu0 0.0
    %1552 = vmatmul.mubr.f32.gmra.mrb[0].mxu0 %v1476
    %v1553 = vpop.f32.mrb[0].mxu0
    %v1554 = vadd.f32 %v1473, %v1553
    %v1555 = vpop.f32.mrb[0].mxu0
    %1556 = vmatprep.mubr.f32.mxu0 0.0
    %1557 = vmatmul.mubr.f32.gmra.mrb[0].mxu0 %v1479
    %v1558 = vpop.f32.mrb[0].mxu0
    %v1559 = vadd.f32 %v1473, %v1558
    %v1560 = vpop.f32.mrb[0].mxu0
    %1561 = vmatprep.mubr.f32.mxu0 0.0
    %1562 = vmatmul.mubr.f32.gmra.mrb[0].mxu0 %v1482
    %v1563 = vpop.f32.mrb[0].mxu0
    %v1564 = vadd.f32 %v1473, %v1563
    %v1565 = vpop.f32.mrb[0].mxu0
    %1566 = vmatprep.mubr.f32.mxu0 0.0
    %1567 = vmatmul.mubr.f32.gmra.mrb[0].mxu0 %v1485
    %v1568 = vpop.f32.mrb[0].mxu0
    %v1569 = vadd.f32 %v1473, %v1568
    %v1570 = vpop.f32.mrb[0].mxu0
    %1571 = vdwg.mxu0
    %v1572 = vadd.f32 %v1312, %v1554
    %v1573 = vadd.f32 %v1313, %v1559
    %v1574 = vadd.f32 %v1314, %v1564
    %v1575 = vadd.f32 %v1315, %v1569
    %v1576 = vld [vmem:[%s20] sm:$0x1]
    %v1577 = vld [vmem:[%s21] sm:$0x1]
    %v1578 = vsel %vm266, %v1572, 0.0
    %1579 = vadd.xlane.f32.xlu0 %v1578
    %v1580 = vpop.xlane.xlu0 %1579
    %v1581 = vsel %vm266, %v1573, 0.0
    %1582 = vadd.xlane.f32.xlu0 %v1581
    %v1583 = vpop.xlane.xlu0 %1582
    %v1584 = vsel %vm266, %v1574, 0.0
    %1585 = vadd.xlane.f32.xlu0 %v1584
    %v1586 = vpop.xlane.xlu0 %1585
    %v1587 = vsel %vm266, %v1575, 0.0
    %1588 = vadd.xlane.f32.xlu0 %v1587
    %v1589 = vpop.xlane.xlu0 %1588
    %v1590 = vmul.f32 %v1580, %v279
    %v1591 = vmul.f32 %v1583, %v279
    %v1592 = vmul.f32 %v1586, %v279
    %v1593 = vmul.f32 %v1589, %v279
    %v1594 = vsub.f32 %v1572, %v1590
    %v1595 = vsub.f32 %v1573, %v1591
    %v1596 = vsub.f32 %v1574, %v1592
    %v1597 = vsub.f32 %v1575, %v1593
    %v1598 = vmul.f32 %v1594, %v1594
    %v1599 = vmul.f32 %v1595, %v1595
    %v1600 = vmul.f32 %v1596, %v1596
    %v1601 = vmul.f32 %v1597, %v1597
    %v1602 = vsel %vm266, %v1598, 0.0
    %1603 = vadd.xlane.f32.xlu0 %v1602
    %v1604 = vpop.xlane.xlu0 %1603
    %v1605 = vsel %vm266, %v1599, 0.0
    %1606 = vadd.xlane.f32.xlu0 %v1605
    %v1607 = vpop.xlane.xlu0 %1606
    %v1608 = vsel %vm266, %v1600, 0.0
    %1609 = vadd.xlane.f32.xlu0 %v1608
    %v1610 = vpop.xlane.xlu0 %1609
    %v1611 = vsel %vm266, %v1601, 0.0
    %1612 = vadd.xlane.f32.xlu0 %v1611
    %v1613 = vpop.xlane.xlu0 %1612
    %v1614 = vmul.f32 %v1604, %v279
    %v1615 = vmul.f32 %v1607, %v279
    %v1616 = vmul.f32 %v1610, %v279
    %v1617 = vmul.f32 %v1613, %v279
    %v1618 = vadd.f32 %v1614, 1e-12
    %v1619 = vadd.f32 %v1615, 1e-12
    %v1620 = vadd.f32 %v1616, 1e-12
    %v1621 = vadd.f32 %v1617, 1e-12
    %v1622 = vrsqrt.pop %v1618
    %v1623 = vrsqrt.pop %v1619
    %v1624 = vrsqrt.pop %v1620
    %v1625 = vrsqrt.pop %v1621
    %v1626 = vmul.f32 %v1594, %v1622
    %v1627 = vmul.f32 %v1595, %v1623
    %v1628 = vmul.f32 %v1596, %v1624
    %v1629 = vmul.f32 %v1597, %v1625
    %v1631 = vlaneseq
    %v1632 = vshrl.u32 %v1631, 7
    %v1633 = vsub.s32 0, %v1632
    %v1634 = vrot.slane %v1576, %v1633
    %v1636 = vmul.f32 %v1626, %v1634
    %v1637 = vmul.f32 %v1627, %v1634
    %v1638 = vmul.f32 %v1628, %v1634
    %v1639 = vmul.f32 %v1629, %v1634
    %v1641 = vlaneseq
    %v1642 = vshrl.u32 %v1641, 7
    %v1643 = vsub.s32 0, %v1642
    %v1644 = vrot.slane %v1577, %v1643
    %v1646 = vadd.f32 %v1636, %v1644
    %v1647 = vadd.f32 %v1637, %v1644
    %v1648 = vadd.f32 %v1638, %v1644
    %v1649 = vadd.f32 %v1639, %v1644
    %v1651 = vrot.slane %v1647, 7
    %v1654 = vrot.slane %v1648, 6
    %v1657 = vrot.slane %v1649, 5
    %vm1659 = vcmask 1040384
    %v1660 = vsel %vm1659, %v1646, %v1651
    %vm1661 = vcmask 1041408
    %v1662 = vsel %vm1661, %v1660, %v1654
    %vm1663 = vcmask 1042432
    %v1664 = vsel %vm1663, %v1662, %v1657
    %v1665 = vld [vmem:[%s22] sm:$0xff]
    %v1666 = vld [vmem:[%s22 + $0x8] sm:$0xff]
    %v1667 = vld [vmem:[%s22 + $0x10] sm:$0xff]
    %v1668 = vld [vmem:[%s22 + $0x18] sm:$0xff]
    %v1669 = vld [vmem:[%s23] sm:$0x1]
    %v1671 = vlaneseq
    %v1672 = vshrl.u32 %v1671, 7
    %v1673 = vsub.s32 0, %v1672
    %v1674 = vrot.slane %v1669, %v1673
    %v1677 = vsel %vm266, %v1664, 0
    %1679 = vmatprep.subr.mxu0 0.0
    %1680 = vmatpush1.msra.mxu0 %v1665
    %1681 = vmatprep.subr.mxu0 0.0
    %1682 = vmatpush1.msra.mxu0 %v1666
    %1683 = vmatprep.subr.mxu0 0.0
    %1684 = vmatpush1.msra.mxu0 %v1667
    %1685 = vmatprep.subr.mxu0 0.0
    %1686 = vmatpush1.msra.mxu0 %v1668
    %1687 = vmatprep.subr.mxu0 0.0
    %1688 = vmatpush1.msra.mxu0 0.0
    %1689 = vmatprep.subr.mxu0 0.0
    %1690 = vmatpush1.msra.mxu0 0.0
    %1691 = vmatprep.subr.mxu0 0.0
    %1692 = vmatpush1.msra.mxu0 0.0
    %1693 = vmatprep.subr.mxu0 0.0
    %1694 = vmatpush1.msra.mxu0 0.0
    %1695 = vmatprep.subr.mxu0 0.0
    %1696 = vmatpush1.msra.mxu0 0.0
    %1697 = vmatprep.subr.mxu0 0.0
    %1698 = vmatpush1.msra.mxu0 0.0
    %1699 = vmatprep.subr.mxu0 0.0
    %1700 = vmatpush1.msra.mxu0 0.0
    %1701 = vmatprep.subr.mxu0 0.0
    %1702 = vmatpush1.msra.mxu0 0.0
    %1703 = vmatprep.subr.mxu0 0.0
    %1704 = vmatpush1.msra.mxu0 0.0
    %1705 = vmatprep.subr.mxu0 0.0
    %1706 = vmatpush1.msra.mxu0 0.0
    %1707 = vmatprep.subr.mxu0 0.0
    %1708 = vmatpush1.msra.mxu0 0.0
    %1709 = vmatprep.subr.mxu0 0.0
    %1710 = vmatpush1.msra.mxu0 0.0
    %1711 = vmatprep.subr.mxu0 0.0
    %1712 = vmatpush1.msra.mxu0 0.0
    %1713 = vmatprep.subr.mxu0 0.0
    %1714 = vmatpush1.msra.mxu0 0.0
    %1715 = vmatprep.subr.mxu0 0.0
    %1716 = vmatpush1.msra.mxu0 0.0
    %1717 = vmatprep.subr.mxu0 0.0
    %1718 = vmatpush1.msra.mxu0 0.0
    %1719 = vmatprep.subr.mxu0 0.0
    %1720 = vmatpush1.msra.mxu0 0.0
    %1721 = vmatprep.subr.mxu0 0.0
    %1722 = vmatpush1.msra.mxu0 0.0
    %1723 = vmatprep.subr.mxu0 0.0
    %1724 = vmatpush1.msra.mxu0 0.0
    %1725 = vmatprep.subr.mxu0 0.0
    %1726 = vmatpush1.msra.mxu0 0.0
    %1727 = vmatprep.subr.mxu0 0.0
    %1728 = vmatpush1.msra.mxu0 0.0
    %1729 = vmatprep.subr.mxu0 0.0
    %1730 = vmatpush1.msra.mxu0 0.0
    %1731 = vmatprep.subr.mxu0 0.0
    %1732 = vmatpush1.msra.mxu0 0.0
    %1733 = vmatprep.subr.mxu0 0.0
    %1734 = vmatpush1.msra.mxu0 0.0
    %1735 = vmatprep.subr.mxu0 0.0
    %1736 = vmatpush1.msra.mxu0 0.0
    %1737 = vmatprep.subr.mxu0 0.0
    %1738 = vmatpush1.msra.mxu0 0.0
    %1739 = vmatprep.subr.mxu0 0.0
    %1740 = vmatpush1.msra.mxu0 0.0
    %1741 = vmatprep.subr.mxu0 0.0
    %1742 = vmatpush1.msra.mxu0 0.0
    %1743 = vmatprep.mubr.f32.mxu0 0.0
    %1744 = vmatmul.mubr.f32.gmra.mrb[0].mxu0 %v1677
    %v1745 = vpop.f32.mrb[0].mxu0
    %v1746 = vadd.f32 %v1674, %v1745
    %v1747 = vpop.f32.mrb[0].mxu0
    %1748 = vdwg.mxu0
    %v1750 = vrot.slane %v1746, 2
    %v1752 = vmul.f32 %v1746, %v1750
    %vm1753 = vcmask 254976
    %v1754 = vsel %vm1753, %v1752, 0.0
    %1755 = vadd.xlane.f32.xlu0 %v1754
    %v1756 = vpop.xlane.xlu0 %1755
    %vm1757 = vcmask 1024
    %1758 = vst.msk [vmem:[%s24] sm:$0x3] %vm1757, %v1756
    %v1759 = vld [vmem:[%s3] sm:$0x3]
    %v1760 = vld [vmem:[#allocation2] sm:$0x1]
    %v1761 = vand.u32 2147483647, %v1756
    %v1762 = vsub.f32 0.0, %v1761
    %v1763 = vmul.f32 %v1762, 1.442695
    %v1764 = vpow.pop %v1763
    %v1765 = vadd.f32 %v1764, 1.0
    %v1766 = vlog2.pop %v1765
    %v1767 = vmul.f32 %v1766, 0.6931472
    %v1768 = vsub.f32 0.0, %v1756
    %v1769 = vmax.f32 %v1768, 0.0
    %v1770 = vadd.f32 %v1769, %v1767
    %v1771 = vmax.f32 %v1756, 0.0
    %v1772 = vadd.f32 %v1771, %v1767
    %v1774 = vlaneseq
    %v1775 = vshrl.u32 %v1774, 7
    %v1776 = vsub.s32 0, %v1775
    %v1777 = vrot.slane %v1760, %v1776
    %v1779 = vmul.f32 %v1777, %v1759
    %v1780 = vmul.f32 %v1779, %v1770
    %v1781 = vsub.f32 1.0, %v1759
    %v1782 = vmul.f32 %v1781, %v1772
    %v1783 = vadd.f32 %v1780, %v1782
    %v1784 = vsel %vm1757, %v1783, 0.0
    %v1785 = vrot.slane %v1784, 4
    %v1786 = vadd.f32 %v1784, %v1785
    %v1787 = vrot.slane %v1786, 2
    %v1788 = vadd.f32 %v1786, %v1787
    %v1789 = vrot.slane %v1788, 1
    %v1790 = vadd.f32 %v1788, %v1789
    %v1791 = vmul.f32 %v1790, 0.5
    %vm1792 = vcmask 0
    %1793 = vst.msk [vmem:[#allocation3] sm:$0x1] %vm1792, %v1791
    // Predicated region
    $region98: #{biencoder_forward.1} parent=1 // pred_check
      _
    $region99: #{biencoder_forward.1} parent=1 // pred_check_branch
      %1795 = sbr.rel (0) target = $region101
    $region100: #{biencoder_forward.1} parent=1 // pred_region
      _
    $region101: #{biencoder_forward.1} parent=1 // pred_fallthru
      _
    // Predicated region
    $region102: #{biencoder_forward.1} parent=1 // pred_check
      _
    $region103: #{biencoder_forward.1} parent=1 // pred_check_branch
      %1797 = sbr.rel (0) target = $region105
    $region104: #{biencoder_forward.1} parent=1 // pred_region
      %s1799 = ssub.s32 16, 16
      %1800 = vsyncadd [#allocation4], %s1799
      %s1802 = sshll.u32 [#allocation3], 4
      %s1803 = int_to_ptr.vmem [resolvable:$true] %s1802
      %1805 = dma.vmem_to_hbm [thread:$0]  %s1803, 16, %s25, [#allocation4]
    $region105: #{biencoder_forward.1} parent=1 // pred_fallthru
      _
    // Predicated region
    $region106: #{biencoder_forward.1} parent=1 // pred_check
      _
    $region107: #{biencoder_forward.1} parent=1 // pred_check_branch
      %1807 = sbr.rel (0) target = $region109
    $region108: #{biencoder_forward.1} parent=1 // pred_region
      _
    $region109: #{biencoder_forward.1} parent=1 // pred_fallthru
      _
    // Predicated region
    $region110: #{biencoder_forward.1} parent=1 // pred_check
      _
    $region111: #{biencoder_forward.1} parent=1 // pred_check_branch
      %1809 = sbr.rel (0) target = $region113
    $region112: #{biencoder_forward.1} parent=1 // pred_region
      %1810 = dma.done [#allocation4], 16
    $region113: #{biencoder_forward.1} parent=1 // pred_fallthru
      _
    %1811 = vsyncpa [#allocation4], 1

</llo_original>
